<compile_context>
chip_gen: v7x
topology: tpu7x:2x2x1
jax: 0.10.0
libtpu: 0.0.40
codegen_flags: <defaults>
</compile_context>

<pallas_src>
import numpy as np

import jax
import jax.numpy as jnp
from jax.experimental import pallas as pl
from jax.experimental.pallas import tpu as pltpu

_LANE = 128
_SUBLANE = 8


def _round_up(x, m):
    return (x + m - 1) // m * m


def _pow2_tile(n, lo, hi):
    """Smallest power-of-two tile in [lo, hi] covering n (or hi if n is larger)."""
    t = lo
    while t < hi and t < n:
        t *= 2
    return t


def _rgcn_fused_kernel(rel_idx_ref, nrel_ref, nst_ref,        # scalar prefetch (SMEM)
                       a_ref, xw_ref, dinv_ref,               # per-relation tiles
                       xd_ref, lw_ref, b_ref,                 # self-loop / bias
                       o_ref):
    t = pl.program_id(0)           # destination node type
    j = pl.program_id(2)           # relation slot within dst type   (reduction)
    s = pl.program_id(3)           # source-node tile                (reduction)
    r_max = pl.num_programs(2)

    @pl.when(jnp.logical_and(j == 0, s == 0))
    def _init():
        # Self-loop + bias folded into the accumulator init: this GEMM overlaps the
        # first relation's DMA instead of extending the epilogue.
        o_ref[...] = (
            jnp.dot(xd_ref[...], lw_ref[...], preferred_element_type=jnp.float32)
            + b_ref[...])

    r = rel_idx_ref[t * r_max + j]
    valid = jnp.logical_and(j < nrel_ref[t],      # real relation slot
                            s < nst_ref[r])       # real (non-padding) src tile

    @pl.when(valid)
    def _accumulate():
        # XW was precomputed outside the kernel; right-norm via precomputed 1/deg.
        msg = jnp.dot(a_ref[...], xw_ref[...], preferred_element_type=jnp.float32)
        o_ref[...] += dinv_ref[...] * msg

    @pl.when(jnp.logical_and(j == r_max - 1, s == pl.num_programs(3) - 1))
    def _finalize():
        o_ref[...] = jnp.maximum(o_ref[...], 0.0)   # ReLU; dropout(p=0.0) = identity


def rel_graph_conv_layer(inputs, relations, rel_weights, loop_weight, h_bias):
    """Fused R-GCN layer forward for all destination node types.

    inputs      : dict ntype -> (N_t, F_in) float32 node features
    relations   : list of (rel_name, src_ntype, dst_ntype, adj) with adj a dense
                  binary (N_dst, N_src) float32 adjacency (rows = destination)
    rel_weights : (R, F_in, F_out) float32 per-relation weights (basis-composed)
    loop_weight : (F_in, F_out) float32
    h_bias      : (F_out,) float32
    returns dict ntype -> (N_t, F_out) float32
    """
    ntypes = list(inputs.keys())
    tindex = {nt: i for i, nt in enumerate(ntypes)}
    num_types = len(ntypes)
    num_rels = len(relations)
    f_in, f_out = loop_weight.shape

    n_sizes = {nt: int(inputs[nt].shape[0]) for nt in ntypes}
    n_max = max(n_sizes.values())
    f_in_pad = _round_up(f_in, _LANE)     # lane-dense MXU operands
    f_out_pad = _round_up(f_out, _LANE)   # lane-dense output stores

    # Tile choice: tile_dst | tile_src | n_pad (all powers of two, lane-aligned).
    tile_src = _pow2_tile(n_max, _LANE, 512)
    tile_dst = _pow2_tile(n_max, _LANE, 256)
    n_pad = _round_up(n_max, tile_src)
    d_tiles = n_pad // tile_dst
    s_tiles = n_pad // tile_src

    # ---- pack node features once per node type (f32 kept for the XW precompute) --
    xs = []
    for nt in ntypes:
        x = inputs[nt].astype(jnp.float32)
        xs.append(jnp.pad(x, ((0, n_pad - x.shape[0]), (0, f_in_pad - f_in))))
    x_f32 = jnp.stack(xs)                       # (T, n_pad, f_in_pad)
    x_bf16 = x_f32.astype(jnp.bfloat16)         # kernel input (self-loop GEMM)

    w_pad = jnp.pad(rel_weights.astype(jnp.float32),
                    ((0, 0), (0, f_in_pad - f_in), (0, f_out_pad - f_out)))
    loop_w = jnp.pad(loop_weight.astype(jnp.float32),
                     ((0, f_in_pad - f_in), (0, f_out_pad - f_out))
                     ).astype(jnp.bfloat16)
    bias = jnp.pad(h_bias.astype(jnp.float32), (0, f_out_pad - f_out))[None, :]

    # ---- adjacency / right-norm 1/deg packed in numpy (single materialization) ---
    a_np = np.zeros((num_rels, n_pad, n_pad), np.float32)
    dinv_np = np.ones((num_rels, n_pad, 1), np.float32)
    src_type = np.zeros((num_rels,), np.int32)
    nst_np = np.ones((num_rels,), np.int32)        # valid src tiles per relation
    for r, (_, s_nt, d_nt, adj) in enumerate(relations):
        adj_h = np.asarray(adj, np.float32)
        nd, ns = adj_h.shape
        a_np[r, :nd, :ns] = adj_h
        deg = np.maximum(adj_h.sum(axis=1, keepdims=True), 1.0)
        dinv_np[r, :nd, :] = 1.0 / deg
        src_type[r] = tindex[s_nt]
        nst_np[r] = max(1, -(-ns // tile_src))
    a_stack = jnp.asarray(a_np).astype(jnp.bfloat16)   # binary -> exact in bf16
    deg_inv = jnp.asarray(dinv_np)                     # f32 right-norm

    # ---- hoisted per-relation GEMM: XW_r = X_src(r) @ W_r (computed ONCE) --------
    xw_stack = jnp.einsum(
        "rnf,rfo->rno", x_f32[jnp.asarray(src_type)], w_pad,
        preferred_element_type=jnp.float32).astype(jnp.bfloat16)   # (R, n_pad, f_out_pad)

    # ---- scalar-prefetch tables: relations grouped by destination type -----------
    rel_by_dst = [[] for _ in range(num_types)]
    for r, (_, _, d_nt, _) in enumerate(relations):
        rel_by_dst[tindex[d_nt]].append(r)
    r_max = max(1, max((len(g) for g in rel_by_dst), default=1))

    rel_idx_np = np.zeros((num_types, r_max), np.int32)
    nrel_np = np.zeros((num_types,), np.int32)
    for t in range(num_types):
        group = rel_by_dst[t]
        nrel_np[t] = len(group)
        for j in range(r_max):
            # padded slots repeat the last valid relation -> no extra DMA
            rel_idx_np[t, j] = group[min(j, len(group) - 1)] if group else 0
    rel_idx = jnp.asarray(rel_idx_np.reshape(-1))      # flat 1-D SMEM tables
    nrel = jnp.asarray(nrel_np)
    nst = jnp.asarray(nst_np)

    # ---- BlockSpecs (index maps get the prefetch refs as trailing args) ----------
    def a_map(t, d, j, s, ri, nr, st):
        r = ri[t * r_max + j]
        return (r, d, jnp.minimum(s, st[r] - 1))       # clamp: padded src tile -> no DMA

    def xw_map(t, d, j, s, ri, nr, st):
        r = ri[t * r_max + j]
        return (r, jnp.minimum(s, st[r] - 1), 0)

    def di_map(t, d, j, s, ri, nr, st):
        return (ri[t * r_max + j], d, 0)

    def xd_map(t, d, j, s, ri, nr, st):
        return (t, d, 0)

    def fixed_map(t, d, j, s, ri, nr, st):
        return (0, 0)

    def out_map(t, d, j, s, ri, nr, st):
        return (t, d, 0)

    grid_spec = pltpu.PrefetchScalarGridSpec(
        num_scalar_prefetch=3,
        grid=(num_types, d_tiles, r_max, s_tiles),
        in_specs=[
            pl.BlockSpec((None, tile_dst, tile_src), a_map),      # A_r tile
            pl.BlockSpec((None, tile_src, f_out_pad), xw_map),    # (X_src @ W_r) tile
            pl.BlockSpec((None, tile_dst, 1), di_map),            # 1/deg (dst rows)
            pl.BlockSpec((None, tile_dst, f_in_pad), xd_map),     # X_dst (self loop)
            pl.BlockSpec((f_in_pad, f_out_pad), fixed_map),       # loop_weight
            pl.BlockSpec((1, f_out_pad), fixed_map),              # bias
        ],
        out_specs=pl.BlockSpec((None, tile_dst, f_out_pad), out_map),
    )

    # Explicit VMEM budget: double-buffered inputs + resident f32 output block.
    vmem_bytes = 2 * (tile_dst * tile_src * 2          # A (bf16)
                      + tile_src * f_out_pad * 2       # XW (bf16)
                      + tile_dst * 4                   # 1/deg (f32)
                      + tile_dst * f_in_pad * 2        # X_dst (bf16)
                      + f_in_pad * f_out_pad * 2       # loop_weight (bf16)
                      + f_out_pad * 4                  # bias (f32)
                      + tile_dst * f_out_pad * 4)      # output accumulator (f32)
    vmem_limit = int(min(64 * 1024 * 1024, max(4 * vmem_bytes, 16 * 1024 * 1024)))

    out = pl.pallas_call(
        _rgcn_fused_kernel,
        out_shape=jax.ShapeDtypeStruct((num_types, n_pad, f_out_pad), jnp.float32),
        grid_spec=grid_spec,
        compiler_params=pltpu.CompilerParams(
            dimension_semantics=("parallel", "parallel", "arbitrary", "arbitrary"),
            vmem_limit_bytes=vmem_limit),
    )(rel_idx, nrel, nst,
      a_stack, xw_stack, deg_inv, x_bf16, loop_w, bias)

    return {nt: out[tindex[nt], :n_sizes[nt], :f_out] for nt in ntypes}


# --------------------------- helpers / reference -----------------------------
def _xavier_uniform(key, shape, gain):
    fan_in, fan_out = shape[-2], shape[-1]
    bound = gain * (6.0 / (fan_in + fan_out)) ** 0.5
    return jax.random.uniform(key, shape, jnp.float32, -bound, bound)


def _reference(inputs, relations, rel_weights, loop_weight, h_bias):
    out = {}
    for nt, x in inputs.items():
        h = x @ loop_weight + h_bias[None, :]
        for r, (_, s, d, adj) in enumerate(relations):
            if d != nt:
                continue
            deg = jnp.maximum(jnp.sum(adj, axis=1, keepdims=True), 1.0)
            h = h + (adj @ inputs[s] / deg) @ rel_weights[r]
        out[nt] = jnp.maximum(h, 0.0)
    return out


if __name__ == "__main__":
    key = jax.random.PRNGKey(0)
    keys = jax.random.split(key, 10)

    # Module config (deterministic synthetic instantiation)
    in_feat, out_feat = 32, 32
    rel_defs = [("r0", "user", "user"),
                ("r1", "user", "item"),
                ("r2", "item", "user")]
    num_rels = len(rel_defs)
    num_bases = 2                    # num_bases < num_rels -> WeightBasis path
    n_user, n_item = 16, 24
    gain = 2.0 ** 0.5                # nn.init.calculate_gain('relu')

    # WeightBasis: per-relation weights = w_comp @ basis
    basis = _xavier_uniform(keys[0], (num_bases, in_feat, out_feat), gain)
    w_comp = _xavier_uniform(keys[1], (num_rels, num_bases), gain)
    rel_weights = jnp.einsum("rb,bio->rio", w_comp, basis)

    loop_weight = _xavier_uniform(keys[2], (in_feat, out_feat), gain)
    h_bias = jnp.zeros((out_feat,), jnp.float32)      # nn.init.zeros_

    inputs = {
        "user": jax.random.normal(keys[3], (n_user, in_feat), jnp.float32),
        "item": jax.random.normal(keys[4], (n_item, in_feat), jnp.float32),
    }
    sizes = {"user": n_user, "item": n_item}

    relations = []
    for i, (name, s, d) in enumerate(rel_defs):
        adj = jax.random.bernoulli(keys[5 + i], 0.3,
                                   (sizes[d], sizes[s])).astype(jnp.float32)
        relations.append((name, s, d, adj))

    out = rel_graph_conv_layer(inputs, relations, rel_weights, loop_weight, h_bias)
    jax.block_until_ready(out)

    # Correctness check against a pure-f32 JAX reference of the same math.
    # (bf16 MXU operands -> loosened tolerance; accumulation stays f32.)
    ref = _reference(inputs, relations, rel_weights, loop_weight, h_bias)
    for nt in inputs:
        assert out[nt].shape == ref[nt].shape, nt
        assert jnp.allclose(out[nt], ref[nt], atol=5e-2, rtol=5e-2), nt

    print("KERNEL_OK")
</pallas_src>

<mosaic_0001>
module attributes {stable_mosaic.version = 11 : i64} {
  func.func @_rgcn_fused_kernel(%arg0: i32, %arg1: i32, %arg2: i32, %arg3: i32, %arg4: memref<4xi32, #tpu.memory_space<smem>>, %arg5: memref<2xi32, #tpu.memory_space<smem>>, %arg6: memref<3xi32, #tpu.memory_space<smem>>, %arg7: memref<1x128x128xbf16, #tpu.memory_space<vmem>>, %arg8: memref<1x128x128xbf16, #tpu.memory_space<vmem>>, %arg9: memref<1x128x1xf32, #tpu.memory_space<vmem>>, %arg10: memref<1x128x128xbf16, #tpu.memory_space<vmem>>, %arg11: memref<128x128xbf16, #tpu.memory_space<vmem>>, %arg12: memref<1x128xf32, #tpu.memory_space<vmem>>, %arg13: memref<1x128x128xf32, #tpu.memory_space<vmem>>) attributes {dimension_semantics = [#tpu.dimension_semantics<parallel>, #tpu.dimension_semantics<parallel>, #tpu.dimension_semantics<arbitrary>, #tpu.dimension_semantics<arbitrary>], iteration_bounds = array<i64: 2, 1, 2, 1>, scalar_prefetch = 3 : i64, scratch_operands = 0 : i64, tpu.core_type = #tpu.core_type<tc>, window_params = [{transform_indices = @transform_0, window_bounds = array<i64: 1, 128, 128>}, {transform_indices = @transform_1, window_bounds = array<i64: 1, 128, 128>}, {transform_indices = @transform_2, window_bounds = array<i64: 1, 128, 1>}, {transform_indices = @transform_3, window_bounds = array<i64: 1, 128, 128>}, {pipeline_mode = #tpu.pipeline_mode<synchronous>, transform_indices = @transform_4, window_bounds = array<i64: 128, 128>}, {pipeline_mode = #tpu.pipeline_mode<synchronous>, transform_indices = @transform_5, window_bounds = array<i64: 1, 128>}, {transform_indices = @transform_6, window_bounds = array<i64: 1, 128, 128>}]} {
    %c0_i32 = arith.constant 0 : i32
    %0 = arith.cmpi eq, %arg2, %c0_i32 : i32
    %c0_i32_0 = arith.constant 0 : i32
    %1 = arith.cmpi eq, %arg3, %c0_i32_0 : i32
    %2 = arith.andi %0, %1 : i1
    %3 = arith.extui %2 : i1 to i32
    %c0_i32_1 = arith.constant 0 : i32
    %4 = arith.cmpi ne, %3, %c0_i32_1 : i32
    scf.if %4 {
      %c0 = arith.constant 0 : index
      %c0_5 = arith.constant 0 : index
      %c0_6 = arith.constant 0 : index
      %23 = vector.load %arg10[%c0, %c0_5, %c0_6] : memref<1x128x128xbf16, #tpu.memory_space<vmem>>, vector<1x128x128xbf16>
      %24 = vector.shape_cast %23 : vector<1x128x128xbf16> to vector<128x128xbf16>
      %c0_7 = arith.constant 0 : index
      %c0_8 = arith.constant 0 : index
      %25 = vector.load %arg11[%c0_7, %c0_8] : memref<128x128xbf16, #tpu.memory_space<vmem>>, vector<128x128xbf16>
      %cst = arith.constant dense<0.000000e+00> : vector<128x128xf32>
      %26 = tpu.matmul %24, %25, %cst {dimension_numbers = #tpu.dot_dimension_numbers<[1], [0], [0], [1], [0, 0, 1, 1], [], []>} : vector<128x128xbf16>, vector<128x128xbf16>, vector<128x128xf32> -> vector<128x128xf32>
      %c0_9 = arith.constant 0 : index
      %c0_10 = arith.constant 0 : index
      %27 = vector.load %arg12[%c0_9, %c0_10] : memref<1x128xf32, #tpu.memory_space<vmem>>, vector<1x128xf32>
      %28 = vector.broadcast %27 : vector<1x128xf32> to vector<128x128xf32>
      %29 = arith.addf %26, %28 : vector<128x128xf32>
      %c0_11 = arith.constant 0 : index
      %c0_12 = arith.constant 0 : index
      %c0_13 = arith.constant 0 : index
      %30 = vector.load %arg13[%c0_11, %c0_12, %c0_13] : memref<1x128x128xf32, #tpu.memory_space<vmem>>, vector<1x128x128xf32>
      %31 = vector.shape_cast %30 : vector<1x128x128xf32> to vector<128x128xf32>
      %32 = vector.shape_cast %29 : vector<128x128xf32> to vector<1x128x128xf32>
      tpu.vector_store %arg13[%c0_11, %c0_12, %c0_13], %32 {strides = array<i32>} : memref<1x128x128xf32, #tpu.memory_space<vmem>>, vector<1x128x128xf32>,
    } else {
    }
    %c2_i32 = arith.constant 2 : i32
    %5 = arith.muli %arg0, %c2_i32 : i32
    %6 = arith.addi %5, %arg2 : i32
    %7 = arith.index_cast %6 : i32 to index
    %8 = memref.load %arg4[%7] : memref<4xi32, #tpu.memory_space<smem>>
    %9 = arith.index_cast %arg0 : i32 to index
    %10 = memref.load %arg5[%9] : memref<2xi32, #tpu.memory_space<smem>>
    %11 = arith.cmpi slt, %arg2, %10 : i32
    %12 = arith.index_cast %8 : i32 to index
    %13 = memref.load %arg6[%12] : memref<3xi32, #tpu.memory_space<smem>>
    %14 = arith.cmpi slt, %arg3, %13 : i32
    %15 = arith.andi %11, %14 : i1
    %16 = arith.extui %15 : i1 to i32
    %c0_i32_2 = arith.constant 0 : i32
    %17 = arith.cmpi ne, %16, %c0_i32_2 : i32
    scf.if %17 {
      %c0 = arith.constant 0 : index
      %c0_5 = arith.constant 0 : index
      %c0_6 = arith.constant 0 : index
      %23 = vector.load %arg7[%c0, %c0_5, %c0_6] : memref<1x128x128xbf16, #tpu.memory_space<vmem>>, vector<1x128x128xbf16>
      %24 = vector.shape_cast %23 : vector<1x128x128xbf16> to vector<128x128xbf16>
      %c0_7 = arith.constant 0 : index
      %c0_8 = arith.constant 0 : index
      %c0_9 = arith.constant 0 : index
      %25 = vector.load %arg8[%c0_7, %c0_8, %c0_9] : memref<1x128x128xbf16, #tpu.memory_space<vmem>>, vector<1x128x128xbf16>
      %26 = vector.shape_cast %25 : vector<1x128x128xbf16> to vector<128x128xbf16>
      %cst = arith.constant dense<0.000000e+00> : vector<128x128xf32>
      %27 = tpu.matmul %24, %26, %cst {dimension_numbers = #tpu.dot_dimension_numbers<[1], [0], [0], [1], [0, 0, 1, 1], [], []>} : vector<128x128xbf16>, vector<128x128xbf16>, vector<128x128xf32> -> vector<128x128xf32>
      %c0_10 = arith.constant 0 : index
      %c0_11 = arith.constant 0 : index
      %c0_12 = arith.constant 0 : index
      %28 = vector.load %arg13[%c0_10, %c0_11, %c0_12] : memref<1x128x128xf32, #tpu.memory_space<vmem>>, vector<1x128x128xf32>
      %29 = vector.shape_cast %28 : vector<1x128x128xf32> to vector<128x128xf32>
      %c0_13 = arith.constant 0 : index
      %c0_14 = arith.constant 0 : index
      %c0_15 = arith.constant 0 : index
      %30 = vector.load %arg9[%c0_13, %c0_14, %c0_15] : memref<1x128x1xf32, #tpu.memory_space<vmem>>, vector<1x128x1xf32>
      %31 = vector.shape_cast %30 : vector<1x128x1xf32> to vector<128x1xf32>
      %32 = vector.broadcast %31 : vector<128x1xf32> to vector<128x128xf32>
      %33 = arith.mulf %32, %27 : vector<128x128xf32>
      %34 = arith.addf %29, %33 : vector<128x128xf32>
      %c0_16 = arith.constant 0 : index
      %c0_17 = arith.constant 0 : index
      %c0_18 = arith.constant 0 : index
      %35 = vector.load %arg13[%c0_16, %c0_17, %c0_18] : memref<1x128x128xf32, #tpu.memory_space<vmem>>, vector<1x128x128xf32>
      %36 = vector.shape_cast %35 : vector<1x128x128xf32> to vector<128x128xf32>
      %37 = vector.shape_cast %34 : vector<128x128xf32> to vector<1x128x128xf32>
      tpu.vector_store %arg13[%c0_16, %c0_17, %c0_18], %37 {strides = array<i32>} : memref<1x128x128xf32, #tpu.memory_space<vmem>>, vector<1x128x128xf32>,
    } else {
    }
    %c1_i32 = arith.constant 1 : i32
    %18 = arith.cmpi eq, %arg2, %c1_i32 : i32
    %c0_i32_3 = arith.constant 0 : i32
    %19 = arith.cmpi eq, %arg3, %c0_i32_3 : i32
    %20 = arith.andi %18, %19 : i1
    %21 = arith.extui %20 : i1 to i32
    %c0_i32_4 = arith.constant 0 : i32
    %22 = arith.cmpi ne, %21, %c0_i32_4 : i32
    scf.if %22 {
      %c0 = arith.constant 0 : index
      %c0_5 = arith.constant 0 : index
      %c0_6 = arith.constant 0 : index
      %23 = vector.load %arg13[%c0, %c0_5, %c0_6] : memref<1x128x128xf32, #tpu.memory_space<vmem>>, vector<1x128x128xf32>
      %24 = vector.shape_cast %23 : vector<1x128x128xf32> to vector<128x128xf32>
      %cst = arith.constant 0.000000e+00 : f32
      %25 = vector.broadcast %cst : f32 to vector<128x128xf32>
      %26 = arith.maximumf %24, %25 : vector<128x128xf32>
      %c0_7 = arith.constant 0 : index
      %c0_8 = arith.constant 0 : index
      %c0_9 = arith.constant 0 : index
      %27 = vector.load %arg13[%c0_7, %c0_8, %c0_9] : memref<1x128x128xf32, #tpu.memory_space<vmem>>, vector<1x128x128xf32>
      %28 = vector.shape_cast %27 : vector<1x128x128xf32> to vector<128x128xf32>
      %29 = vector.shape_cast %26 : vector<128x128xf32> to vector<1x128x128xf32>
      tpu.vector_store %arg13[%c0_7, %c0_8, %c0_9], %29 {strides = array<i32>} : memref<1x128x128xf32, #tpu.memory_space<vmem>>, vector<1x128x128xf32>,
    } else {
    }
    return
  }
  func.func @transform_0(%arg0: i32, %arg1: i32, %arg2: i32, %arg3: i32, %arg4: memref<4xi32, #tpu.memory_space<smem>>, %arg5: memref<2xi32, #tpu.memory_space<smem>>, %arg6: memref<3xi32, #tpu.memory_space<smem>>) -> (i32, i32, i32) {
    %c2_i32 = arith.constant 2 : i32
    %0 = arith.muli %arg0, %c2_i32 : i32
    %1 = arith.addi %0, %arg2 : i32
    %2 = arith.index_cast %1 : i32 to index
    %3 = memref.load %arg4[%2] : memref<4xi32, #tpu.memory_space<smem>>
    %4 = arith.index_cast %3 : i32 to index
    %5 = memref.load %arg6[%4] : memref<3xi32, #tpu.memory_space<smem>>
    %c1_i32 = arith.constant 1 : i32
    %6 = arith.subi %5, %c1_i32 : i32
    %7 = arith.minsi %arg3, %6 : i32
    %c0_i32 = arith.constant 0 : i32
    return %3, %arg1, %7 : i32, i32, i32
  }
  func.func @transform_1(%arg0: i32, %arg1: i32, %arg2: i32, %arg3: i32, %arg4: memref<4xi32, #tpu.memory_space<smem>>, %arg5: memref<2xi32, #tpu.memory_space<smem>>, %arg6: memref<3xi32, #tpu.memory_space<smem>>) -> (i32, i32, i32) {
    %c2_i32 = arith.constant 2 : i32
    %0 = arith.muli %arg0, %c2_i32 : i32
    %1 = arith.addi %0, %arg2 : i32
    %2 = arith.index_cast %1 : i32 to index
    %3 = memref.load %arg4[%2] : memref<4xi32, #tpu.memory_space<smem>>
    %4 = arith.index_cast %3 : i32 to index
    %5 = memref.load %arg6[%4] : memref<3xi32, #tpu.memory_space<smem>>
    %c1_i32 = arith.constant 1 : i32
    %6 = arith.subi %5, %c1_i32 : i32
    %7 = arith.minsi %arg3, %6 : i32
    %c0_i32 = arith.constant 0 : i32
    %c0_i32_0 = arith.constant 0 : i32
    return %3, %7, %c0_i32 : i32, i32, i32
  }
  func.func @transform_2(%arg0: i32, %arg1: i32, %arg2: i32, %arg3: i32, %arg4: memref<4xi32, #tpu.memory_space<smem>>, %arg5: memref<2xi32, #tpu.memory_space<smem>>, %arg6: memref<3xi32, #tpu.memory_space<smem>>) -> (i32, i32, i32) {
    %c2_i32 = arith.constant 2 : i32
    %0 = arith.muli %arg0, %c2_i32 : i32
    %1 = arith.addi %0, %arg2 : i32
    %2 = arith.index_cast %1 : i32 to index
    %3 = memref.load %arg4[%2] : memref<4xi32, #tpu.memory_space<smem>>
    %c0_i32 = arith.constant 0 : i32
    %c0_i32_0 = arith.constant 0 : i32
    return %3, %arg1, %c0_i32 : i32, i32, i32
  }
  func.func @transform_3(%arg0: i32, %arg1: i32, %arg2: i32, %arg3: i32, %arg4: memref<4xi32, #tpu.memory_space<smem>>, %arg5: memref<2xi32, #tpu.memory_space<smem>>, %arg6: memref<3xi32, #tpu.memory_space<smem>>) -> (i32, i32, i32) {
    %c0_i32 = arith.constant 0 : i32
    %c0_i32_0 = arith.constant 0 : i32
    return %arg0, %arg1, %c0_i32 : i32, i32, i32
  }
  func.func @transform_4(%arg0: i32, %arg1: i32, %arg2: i32, %arg3: i32, %arg4: memref<4xi32, #tpu.memory_space<smem>>, %arg5: memref<2xi32, #tpu.memory_space<smem>>, %arg6: memref<3xi32, #tpu.memory_space<smem>>) -> (i32, i32) {
    %c0_i32 = arith.constant 0 : i32
    %c0_i32_0 = arith.constant 0 : i32
    %c0_i32_1 = arith.constant 0 : i32
    return %c0_i32, %c0_i32_0 : i32, i32
  }
  func.func @transform_5(%arg0: i32, %arg1: i32, %arg2: i32, %arg3: i32, %arg4: memref<4xi32, #tpu.memory_space<smem>>, %arg5: memref<2xi32, #tpu.memory_space<smem>>, %arg6: memref<3xi32, #tpu.memory_space<smem>>) -> (i32, i32) {
    %c0_i32 = arith.constant 0 : i32
    %c0_i32_0 = arith.constant 0 : i32
    %c0_i32_1 = arith.constant 0 : i32
    return %c0_i32, %c0_i32_0 : i32, i32
  }
  func.func @transform_6(%arg0: i32, %arg1: i32, %arg2: i32, %arg3: i32, %arg4: memref<4xi32, #tpu.memory_space<smem>>, %arg5: memref<2xi32, #tpu.memory_space<smem>>, %arg6: memref<3xi32, #tpu.memory_space<smem>>) -> (i32, i32, i32) {
    %c0_i32 = arith.constant 0 : i32
    %c0_i32_0 = arith.constant 0 : i32
    return %arg0, %arg1, %c0_i32 : i32, i32, i32
  }
}

</mosaic_0001>

<llo_original>
// kernel: tpu_custom_call.1
$region0: #{tpu_custom_call.1}
  #allocation0 [shape = 'u32[]', space=smem, size = 0x4, offset = 0x4, fixed_abs, tag = 'smem constant byte address 0x4 - core index']
  #allocation1 [shape = 'u32[144,128]{1,0:T(1,128)}', space=vmem, size = 0x12000, scoped, tag = 'internal scratch']
  #allocation2 [shape = 's32[1]{0}', space=sflag, size = 0x4, scoped, tag = 'scoped memory for tpu_custom_call.1']
  #allocation3 [shape = 'u8[512]{0}', space=smem, size = 0x200, scoped, tag = 'prefetched SMEM operand 0']
  #allocation4 [shape = 'u8[512]{0}', space=smem, size = 0x200, scoped, tag = 'prefetched SMEM operand 1']
  #allocation5 [shape = 'u8[512]{0}', space=smem, size = 0x200, scoped, tag = 'prefetched SMEM operand 2']
  %s0 = inlined_call_operand.vmem [shape: s32[4], index: 0, kind: input, shape index: {}]
  %s1 = inlined_call_operand.vmem [shape: s32[2], index: 1, kind: input, shape index: {}]
  %s2 = inlined_call_operand.vmem [shape: s32[3], index: 2, kind: input, shape index: {}]
  %s3 = inlined_call_operand.vmem [shape: bf16[3,128,128], index: 3, kind: input, shape index: {}]
  %s4 = inlined_call_operand.vmem [shape: bf16[3,128,128], index: 4, kind: input, shape index: {}]
  %s5 = inlined_call_operand.vmem [shape: f32[3,128,1], index: 5, kind: input, shape index: {}]
  %s6 = inlined_call_operand.hbm [shape: bf16[2,128,128], index: 6, kind: input, shape index: {}]
  %s7 = inlined_call_operand.hbm [shape: bf16[128,128], index: 7, kind: input, shape index: {}]
  %s8 = inlined_call_operand.vmem [shape: f32[1,128], index: 8, kind: input, shape index: {}]
  %s9 = inlined_call_operand.hbm [shape: f32[2,128,128], index: 9, kind: output, shape index: {}]
  %s10 = sld [smem:[#allocation0]]
  $region77: #{tpu_custom_call.1} parent=0
    _
  %s12 = ssub.s32 1, %s10
  %s13 = scalar_select 0, %s12, %s10
  %s14 = sshll.u32 %s0, 4
  %s15 = int_to_ptr.vmem [resolvable:$true] %s14
  %17 = dma.vmem_to_smem %s15, 16, [#allocation3], [#allocation2]
  %s18 = sshll.u32 %s1, 4
  %s19 = int_to_ptr.vmem [resolvable:$true] %s18
  %21 = dma.vmem_to_smem %s19, 16, [#allocation4], [#allocation2]
  %s22 = sshll.u32 %s2, 4
  %s23 = int_to_ptr.vmem [resolvable:$true] %s22
  %25 = dma.vmem_to_smem %s23, 16, [#allocation5], [#allocation2]
  %26 = dma.done [#allocation2], 48
  %27 = sfence
  $region1: #{tpu_custom_call.1} parent=0
    #allocation6 [shape = 'u8[65536]{0}', space=vmem, size = 0x10000, scoped, tag = 'input window, operand 6']
    #allocation7 [shape = 's32[2]{0}', space=sflag, size = 0x8, scoped, tag = 'scoped memory for tpu_custom_call.1']
    #allocation8 [shape = 's32[2]{0}', space=sflag, size = 0x8, scoped, tag = 'scoped memory for tpu_custom_call.1']
    #allocation9 [shape = 'u8[32768]{0}', space=vmem, size = 0x8000, scoped, tag = 'input window, operand 7, single buffered']
    #allocation10 [shape = 's32[1]{0}', space=sflag, size = 0x4, scoped, tag = 'scoped memory for tpu_custom_call.1']
    #allocation11 [shape = 'u8[131072]{0}', space=vmem, size = 0x20000, scoped, tag = 'output window, operand 0']
    %28 = vsyncpa [#allocation7], 0
    %s29 = scalar_lea.sflag [#allocation7], 1
    %30 = vsyncpa %s29, 0
    %31 = vsyncpa [#allocation10], 0
    %32 = vsyncpa [#allocation8], 0
    %s33 = scalar_lea.sflag [#allocation8], 1
    %34 = vsyncpa %s33, 0
    loop: start=0, step=1, limit=6
    $region2: #{tpu_custom_call.1} parent=1 // loop_pre_header
      _
    $region3: #{tpu_custom_call.1} parent=1 // loop_header
      %s36 = sphi 0, %s40
      %p37 = scmp.ge.s32.totalorder %s36, 6
      %s43 = sphi 0, %s69
      %s44 = sphi 0, %s65
      %s45 = sphi 0, %s61
      %s46 = sphi 0, %s57
      %s47 = sphi 0, %s43
      %s48 = sphi 0, %s44
      %s49 = sphi 0, %s45
      %s50 = sphi 0, %s46
      %s51 = sphi 0, %s47
      %s52 = sphi 0, %s48
      %s53 = sphi 0, %s49
      %s54 = sphi 0, %s50
      %s90 = sphi 0, %s92
      %s93 = sphi 0, %s90
      %s94 = sphi 0, %s93
      %s110 = sphi 0, %s94
      %s132 = sphi 0, %s134
      %s135 = sphi 0, %s132
      %s136 = sphi 0, %s135
      %s152 = sphi 0, %s136
      %s166 = sphi 0, %s168
      %s169 = sphi 0, %s166
      %s170 = sphi 0, %s169
      %s186 = sphi 0, %s170
      %s194 = sphi 0, %s196
      %s197 = sphi 0, %s194
      %s198 = sphi 0, %s197
      %s214 = sphi 0, %s198
      %s218 = sphi 0, %s218
      %s220 = sphi 0, %s218
      %s221 = sphi 0, %s220
      %s235 = sphi 0, %s221
      %s239 = sphi 0, %s239
      %s241 = sphi 0, %s239
      %s242 = sphi 0, %s241
      %s256 = sphi 0, %s242
      %s264 = sphi 0, %s266
      %s267 = sphi 0, %s264
      %s268 = sphi 0, %s267
      %s284 = sphi 0, %s268
    $region4: #{tpu_custom_call.1} parent=1 // loop_header_branch
      %39 = sbr.rel (%p37) target = $region8
    $region5: #{tpu_custom_call.1} parent=1 // loop_body
      %s41 = ssub.s32 %s36, 1
      %s42 = ssub.s32 %s36, 2
      %s55 = sadd.s32 1, %s46
      %p56 = scmp.ge.s32.totalorder %s55, 1
      %s57 = scalar_select %p56, 0, %s55
      %s58 = sadd.s32 1, %s45
      %s59 = scalar_select %p56, %s58, %s45
      %p60 = scmp.ge.s32.totalorder %s59, 2
      %s61 = scalar_select %p60, 0, %s59
      %s62 = sadd.s32 1, %s44
      %s63 = scalar_select %p60, %s62, %s44
      %p64 = scmp.ge.s32.totalorder %s63, 1
      %s65 = scalar_select %p64, 0, %s63
      %s66 = sadd.s32 1, %s43
      %s67 = scalar_select %p64, %s66, %s43
      %p68 = scmp.ge.s32.totalorder %s67, 2
      %s69 = scalar_select %p68, 0, %s67
      %s70 = smul.u32 %s43, 2
      %s71 = sadd.s32 %s70, %s45
      %s72 = sld [smem:[#allocation3 + %s71]]
      %s73 = sld [smem:[#allocation5 + %s72]]
      %s74 = ssub.s32 %s73, 1
      %p75 = scmp.lt.s32.totalorder %s46, %s74
      %s76 = scalar_select %p75, %s46, %s74
      %s77 = smul.u32 %s69, 2
      %s78 = sadd.s32 %s77, %s61
      %s79 = sld [smem:[#allocation3 + %s78]]
      %s80 = sld [smem:[#allocation5 + %s79]]
      %s81 = ssub.s32 %s80, 1
      %p82 = scmp.lt.s32.totalorder %s57, %s81
      %s83 = scalar_select %p82, %s57, %s81
      %s84 = ssub.s32 %s72, %s79
      %s85 = ssub.s32 %s44, %s65
      %s86 = sor.u32 %s84, %s85
      %s87 = ssub.s32 %s76, %s83
      %s88 = sor.u32 %s86, %s87
      %p89 = scmp.eq.s32.totalorder %s88, 0
      %s91 = sadd.s32 %s90, 1
      %s92 = scalar_select %p89, %s90, %s91
      %p95 = pneg %p89
      %p96 = scmp.eq.s32.totalorder %s36, 3
      %p97 = por %p95, %p96
      %p98 = scmp.ne.s32.totalorder %s90, %s93
      %p99 = scmp.eq.s32.totalorder %s36, 0
      %p100 = por %p98, %p99
      %p101 = scmp.ne.s32.totalorder %s90, %s93
      %p102 = scmp.eq.s32.totalorder %s41, 3
      %p103 = por %p101, %p102
      %p104 = scmp.ne.s32.totalorder %s93, %s94
      %p105 = scmp.eq.s32.totalorder %s41, 0
      %p106 = por %p104, %p105
      %p107 = scmp.ne.s32.totalorder %s93, %s94
      %p108 = scmp.eq.s32.totalorder %s42, 3
      %p109 = por %p107, %p108
      %p111 = scmp.ne.s32.totalorder %s94, %s110
      %p112 = scmp.eq.s32.totalorder %s42, 0
      %p113 = por %p111, %p112
      %s114 = smul.u32 %s43, 2
      %s115 = sadd.s32 %s114, %s45
      %s116 = sld [smem:[#allocation3 + %s115]]
      %s117 = sld [smem:[#allocation5 + %s116]]
      %s118 = ssub.s32 %s117, 1
      %p119 = scmp.lt.s32.totalorder %s46, %s118
      %s120 = scalar_select %p119, %s46, %s118
      %s121 = smul.u32 %s69, 2
      %s122 = sadd.s32 %s121, %s61
      %s123 = sld [smem:[#allocation3 + %s122]]
      %s124 = sld [smem:[#allocation5 + %s123]]
      %s125 = ssub.s32 %s124, 1
      %p126 = scmp.lt.s32.totalorder %s57, %s125
      %s127 = scalar_select %p126, %s57, %s125
      %s128 = ssub.s32 %s116, %s123
      %s129 = ssub.s32 %s120, %s127
      %s130 = sor.u32 %s128, %s129
      %p131 = scmp.eq.s32.totalorder %s130, 0
      %s133 = sadd.s32 %s132, 1
      %s134 = scalar_select %p131, %s132, %s133
      %p137 = pneg %p131
      %p138 = scmp.eq.s32.totalorder %s36, 3
      %p139 = por %p137, %p138
      %p140 = scmp.ne.s32.totalorder %s132, %s135
      %p141 = scmp.eq.s32.totalorder %s36, 0
      %p142 = por %p140, %p141
      %p143 = scmp.ne.s32.totalorder %s132, %s135
      %p144 = scmp.eq.s32.totalorder %s41, 3
      %p145 = por %p143, %p144
      %p146 = scmp.ne.s32.totalorder %s135, %s136
      %p147 = scmp.eq.s32.totalorder %s41, 0
      %p148 = por %p146, %p147
      %p149 = scmp.ne.s32.totalorder %s135, %s136
      %p150 = scmp.eq.s32.totalorder %s42, 3
      %p151 = por %p149, %p150
      %p153 = scmp.ne.s32.totalorder %s136, %s152
      %p154 = scmp.eq.s32.totalorder %s42, 0
      %p155 = por %p153, %p154
      %s156 = smul.u32 %s43, 2
      %s157 = sadd.s32 %s156, %s45
      %s158 = sld [smem:[#allocation3 + %s157]]
      %s159 = smul.u32 %s69, 2
      %s160 = sadd.s32 %s159, %s61
      %s161 = sld [smem:[#allocation3 + %s160]]
      %s162 = ssub.s32 %s158, %s161
      %s163 = ssub.s32 %s44, %s65
      %s164 = sor.u32 %s162, %s163
      %p165 = scmp.eq.s32.totalorder %s164, 0
      %s167 = sadd.s32 %s166, 1
      %s168 = scalar_select %p165, %s166, %s167
      %p171 = pneg %p165
      %p172 = scmp.eq.s32.totalorder %s36, 3
      %p173 = por %p171, %p172
      %p174 = scmp.ne.s32.totalorder %s166, %s169
      %p175 = scmp.eq.s32.totalorder %s36, 0
      %p176 = por %p174, %p175
      %p177 = scmp.ne.s32.totalorder %s166, %s169
      %p178 = scmp.eq.s32.totalorder %s41, 3
      %p179 = por %p177, %p178
      %p180 = scmp.ne.s32.totalorder %s169, %s170
      %p181 = scmp.eq.s32.totalorder %s41, 0
      %p182 = por %p180, %p181
      %p183 = scmp.ne.s32.totalorder %s169, %s170
      %p184 = scmp.eq.s32.totalorder %s42, 3
      %p185 = por %p183, %p184
      %p187 = scmp.ne.s32.totalorder %s170, %s186
      %p188 = scmp.eq.s32.totalorder %s42, 0
      %p189 = por %p187, %p188
      %s190 = ssub.s32 %s43, %s69
      %s191 = ssub.s32 %s44, %s65
      %s192 = sor.u32 %s190, %s191
      %p193 = scmp.eq.s32.totalorder %s192, 0
      %s195 = sadd.s32 %s194, 1
      %s196 = scalar_select %p193, %s194, %s195
      %p199 = pneg %p193
      %p200 = scmp.eq.s32.totalorder %s36, 3
      %p201 = por %p199, %p200
      %p202 = scmp.ne.s32.totalorder %s194, %s197
      %p203 = scmp.eq.s32.totalorder %s36, 0
      %p204 = por %p202, %p203
      %p205 = scmp.ne.s32.totalorder %s194, %s197
      %p206 = scmp.eq.s32.totalorder %s41, 3
      %p207 = por %p205, %p206
      %p208 = scmp.ne.s32.totalorder %s197, %s198
      %p209 = scmp.eq.s32.totalorder %s41, 0
      %p210 = por %p208, %p209
      %p211 = scmp.ne.s32.totalorder %s197, %s198
      %p212 = scmp.eq.s32.totalorder %s42, 3
      %p213 = por %p211, %p212
      %p215 = scmp.ne.s32.totalorder %s198, %s214
      %p216 = scmp.eq.s32.totalorder %s42, 0
      %p217 = por %p215, %p216
      %s219 = sadd.s32 %s218, 1
      %p222 = scmp.eq.s32.totalorder %s36, 3
      %p223 = scmp.ne.s32.totalorder %s218, %s220
      %p224 = scmp.eq.s32.totalorder %s36, 0
      %p225 = por %p223, %p224
      %p226 = scmp.ne.s32.totalorder %s218, %s220
      %p227 = scmp.eq.s32.totalorder %s41, 3
      %p228 = por %p226, %p227
      %p229 = scmp.ne.s32.totalorder %s220, %s221
      %p230 = scmp.eq.s32.totalorder %s41, 0
      %p231 = por %p229, %p230
      %p232 = scmp.ne.s32.totalorder %s220, %s221
      %p233 = scmp.eq.s32.totalorder %s42, 3
      %p234 = por %p232, %p233
      %p236 = scmp.ne.s32.totalorder %s221, %s235
      %p237 = scmp.eq.s32.totalorder %s42, 0
      %p238 = por %p236, %p237
      %s240 = sadd.s32 %s239, 1
      %p243 = scmp.eq.s32.totalorder %s36, 3
      %p244 = scmp.ne.s32.totalorder %s239, %s241
      %p245 = scmp.eq.s32.totalorder %s36, 0
      %p246 = por %p244, %p245
      %p247 = scmp.ne.s32.totalorder %s239, %s241
      %p248 = scmp.eq.s32.totalorder %s41, 3
      %p249 = por %p247, %p248
      %p250 = scmp.ne.s32.totalorder %s241, %s242
      %p251 = scmp.eq.s32.totalorder %s41, 0
      %p252 = por %p250, %p251
      %p253 = scmp.ne.s32.totalorder %s241, %s242
      %p254 = scmp.eq.s32.totalorder %s42, 3
      %p255 = por %p253, %p254
      %p257 = scmp.ne.s32.totalorder %s242, %s256
      %p258 = scmp.eq.s32.totalorder %s42, 0
      %p259 = por %p257, %p258
      %s260 = ssub.s32 %s43, %s69
      %s261 = ssub.s32 %s44, %s65
      %s262 = sor.u32 %s260, %s261
      %p263 = scmp.eq.s32.totalorder %s262, 0
      %s265 = sadd.s32 %s264, 1
      %s266 = scalar_select %p263, %s264, %s265
      %p269 = pneg %p263
      %p270 = scmp.eq.s32.totalorder %s36, 3
      %p271 = por %p269, %p270
      %p272 = scmp.ne.s32.totalorder %s264, %s267
      %p273 = scmp.eq.s32.totalorder %s36, 0
      %p274 = por %p272, %p273
      %p275 = scmp.ne.s32.totalorder %s264, %s267
      %p276 = scmp.eq.s32.totalorder %s41, 3
      %p277 = por %p275, %p276
      %p278 = scmp.ne.s32.totalorder %s267, %s268
      %p279 = scmp.eq.s32.totalorder %s41, 0
      %p280 = por %p278, %p279
      %p281 = scmp.ne.s32.totalorder %s267, %s268
      %p282 = scmp.eq.s32.totalorder %s42, 3
      %p283 = por %p281, %p282
      %p285 = scmp.ne.s32.totalorder %s268, %s284
      %p286 = scmp.eq.s32.totalorder %s42, 0
      %p287 = por %p285, %p286
      %p288 = scmp.le.s32.totalorder 1, %s36
      %p289 = scmp.lt.s32.totalorder %s36, 5
      %p290 = pnand %p288, %p289
      %p291 = pneg %p290
      // Predicated region
      $region9: #{tpu_custom_call.1} parent=5 // pred_check
        _
      $region10: #{tpu_custom_call.1} parent=5 // pred_check_branch
        %293 = sbr.rel (%p290) target = $region12
      $region11: #{tpu_custom_call.1} parent=5 // pred_region
        %s294 = ssub.s32 %s36, 1
        // Predicated region
        $region13: #{tpu_custom_call.1} parent=11 // pred_check
          %p295 = pneg %p231
        $region14: #{tpu_custom_call.1} parent=11 // pred_check_branch
          %297 = sbr.rel (%p295) target = $region16
        $region15: #{tpu_custom_call.1} parent=11 // pred_region
          %s299 = ssub.s32 1024, 1024
          %300 = vsyncadd [#allocation10], %s299
          %s301 = sshll.u32 [#allocation9], 4
          %s302 = int_to_ptr.vmem [resolvable:$true] %s301
          %307 = dma.hbm_to_vmem [thread:$0]  %s7, 1024, %s302, [#allocation10], 64, 64, 4
        $region16: #{tpu_custom_call.1} parent=11 // pred_fallthru
          _
        // Predicated region
        $region17: #{tpu_custom_call.1} parent=11 // pred_check
          %p308 = pneg %p252
        $region18: #{tpu_custom_call.1} parent=11 // pred_check_branch
          %310 = sbr.rel (%p308) target = $region20
        $region19: #{tpu_custom_call.1} parent=11 // pred_region
          _
        $region20: #{tpu_custom_call.1} parent=11 // pred_fallthru
          _
      $region12: #{tpu_custom_call.1} parent=5 // pred_fallthru
        _
      %p311 = scmp.lt.s32.totalorder %s36, 4
      // Predicated region
      $region21: #{tpu_custom_call.1} parent=5 // pred_check
        %p312 = pneg %p311
      $region22: #{tpu_custom_call.1} parent=5 // pred_check_branch
        %314 = sbr.rel (%p312) target = $region24
      $region23: #{tpu_custom_call.1} parent=5 // pred_region
        // Predicated region
        $region25: #{tpu_custom_call.1} parent=23 // pred_check
          %p315 = pneg %p100
        $region26: #{tpu_custom_call.1} parent=23 // pred_check_branch
          %317 = sbr.rel (%p315) target = $region28
        $region27: #{tpu_custom_call.1} parent=23 // pred_region
          %s318 = smul.u32 %s43, 2
          %s319 = sadd.s32 %s318, %s45
          %s320 = sld [smem:[#allocation3 + %s319]]
          %s321 = sld [smem:[#allocation5 + %s320]]
          %s322 = ssub.s32 %s321, 1
          %p323 = scmp.lt.s32.totalorder %s46, %s322
          %s324 = scalar_select %p323, %s46, %s322
          %s325 = smul.u32 16, %s44
          %p326 = scmp.lt.s32.totalorder %s320, 2
          %s327 = scalar_select %p326, %s320, 2
          %p328 = scmp.lt.s32.totalorder %s325, 15
          %s329 = scalar_select %p328, %s325, 15
          %p330 = scmp.lt.s32.totalorder %s324, 0
          %s331 = scalar_select %p330, %s324, 0
          %s332 = sadd.s32 %s331, %s329
          %s333 = smul.addr %s327, 16
          %s334 = sadd.s32 %s332, %s333
          %s335 = smul.addr %s334, 4
          %s336 = scalar_lea.vmem %s3, %s335
          %s337 = smul.u32 %s43, 2
          %s338 = sadd.s32 %s337, %s45
          %s339 = sld [smem:[#allocation3 + %s338]]
          %s340 = sld [smem:[#allocation5 + %s339]]
          %s341 = ssub.s32 %s340, 1
          %p342 = scmp.lt.s32.totalorder %s46, %s341
          %s343 = scalar_select %p342, %s46, %s341
          %s344 = smul.u32 16, %s44
        $region28: #{tpu_custom_call.1} parent=23 // pred_fallthru
          _
        // Predicated region
        $region29: #{tpu_custom_call.1} parent=23 // pred_check
          %p345 = pneg %p142
        $region30: #{tpu_custom_call.1} parent=23 // pred_check_branch
          %347 = sbr.rel (%p345) target = $region32
        $region31: #{tpu_custom_call.1} parent=23 // pred_region
          %s348 = smul.u32 %s43, 2
          %s349 = sadd.s32 %s348, %s45
          %s350 = sld [smem:[#allocation3 + %s349]]
          %s351 = sld [smem:[#allocation5 + %s350]]
          %s352 = ssub.s32 %s351, 1
          %p353 = scmp.lt.s32.totalorder %s46, %s352
          %s354 = scalar_select %p353, %s46, %s352
          %s355 = smul.u32 16, %s354
          %p356 = scmp.lt.s32.totalorder %s350, 2
          %s357 = scalar_select %p356, %s350, 2
          %p358 = scmp.lt.s32.totalorder %s355, 15
          %s359 = scalar_select %p358, %s355, 15
          %s360 = smul.addr %s357, 16
          %s361 = sadd.s32 %s359, %s360
          %s362 = smul.addr %s361, 4
          %s363 = scalar_lea.vmem %s4, %s362
          %s364 = smul.u32 %s43, 2
          %s365 = sadd.s32 %s364, %s45
          %s366 = sld [smem:[#allocation3 + %s365]]
          %s367 = sld [smem:[#allocation5 + %s366]]
          %s368 = ssub.s32 %s367, 1
          %p369 = scmp.lt.s32.totalorder %s46, %s368
          %s370 = scalar_select %p369, %s46, %s368
          %s371 = smul.u32 16, %s370
        $region32: #{tpu_custom_call.1} parent=23 // pred_fallthru
          _
        // Predicated region
        $region33: #{tpu_custom_call.1} parent=23 // pred_check
          %p372 = pneg %p176
        $region34: #{tpu_custom_call.1} parent=23 // pred_check_branch
          %374 = sbr.rel (%p372) target = $region36
        $region35: #{tpu_custom_call.1} parent=23 // pred_region
          %s375 = smul.u32 %s43, 2
          %s376 = sadd.s32 %s375, %s45
          %s377 = sld [smem:[#allocation3 + %s376]]
          %s378 = smul.u32 16, %s44
          %p379 = scmp.lt.s32.totalorder %s377, 2
          %s380 = scalar_select %p379, %s377, 2
          %p381 = scmp.lt.s32.totalorder %s378, 15
          %s382 = scalar_select %p381, %s378, 15
          %s383 = smul.addr %s380, 16
          %s384 = sadd.s32 %s382, %s383
          %s385 = smul.addr %s384, 8
          %s386 = scalar_lea.vmem %s5, %s385
          %s387 = smul.u32 %s43, 2
          %s388 = sadd.s32 %s387, %s45
          %s389 = sld [smem:[#allocation3 + %s388]]
          %s390 = smul.u32 16, %s44
        $region36: #{tpu_custom_call.1} parent=23 // pred_fallthru
          _
        // Predicated region
        $region37: #{tpu_custom_call.1} parent=23 // pred_check
          %p391 = pneg %p204
        $region38: #{tpu_custom_call.1} parent=23 // pred_check_branch
          %393 = sbr.rel (%p391) target = $region40
        $region39: #{tpu_custom_call.1} parent=23 // pred_region
          %s394 = sand.u32 %s194, 1
          %s395 = scalar_lea.sflag [#allocation7], %s394
          %s396 = sand.u32 %s194, 1
          %s397 = smul.addr %s396, 64
          %s398 = scalar_lea.vmem [#allocation6], %s397
          %s399 = smul.u32 16, %s44
          %s401 = ssub.s32 1024, 1024
          %402 = vsyncadd %s395, %s401
          %s403 = smul.addr %s43, 16
          %s404 = sadd.s32 %s399, %s403
          %s405 = smul.addr %s404, 64
          %s406 = scalar_lea.hbm %s6, %s405
          %s407 = sshll.u32 %s398, 4
          %s408 = int_to_ptr.vmem [resolvable:$true] %s407
          %413 = dma.hbm_to_vmem [thread:$0]  %s406, 1024, %s408, %s395, 64, 64, 4
        $region40: #{tpu_custom_call.1} parent=23 // pred_fallthru
          _
      $region24: #{tpu_custom_call.1} parent=5 // pred_fallthru
        _
      %p414 = scmp.le.s32.totalorder 1, %s36
      %p415 = scmp.lt.s32.totalorder %s36, 5
      %p416 = pnand %p414, %p415
      %p417 = pneg %p416
      // Predicated region
      $region41: #{tpu_custom_call.1} parent=5 // pred_check
        _
      $region42: #{tpu_custom_call.1} parent=5 // pred_check_branch
        %419 = sbr.rel (%p416) target = $region44
      $region43: #{tpu_custom_call.1} parent=5 // pred_region
        %s420 = ssub.s32 %s36, 1
        %s421 = sand.u32 %s197, 1
        %s422 = scalar_lea.sflag [#allocation7], %s421
        %s423 = sand.u32 %s197, 1
        %s424 = smul.addr %s423, 64
        %s425 = scalar_lea.vmem [#allocation6], %s424
        // Predicated region
        $region45: #{tpu_custom_call.1} parent=43 // pred_check
          %p426 = pneg %p210
        $region46: #{tpu_custom_call.1} parent=43 // pred_check_branch
          %428 = sbr.rel (%p426) target = $region48
        $region47: #{tpu_custom_call.1} parent=43 // pred_region
          %429 = dma.done %s422, 1024
        $region48: #{tpu_custom_call.1} parent=43 // pred_fallthru
          _
        // Predicated region
        $region49: #{tpu_custom_call.1} parent=43 // pred_check
          %p430 = pneg %p231
        $region50: #{tpu_custom_call.1} parent=43 // pred_check_branch
          %432 = sbr.rel (%p430) target = $region52
        $region51: #{tpu_custom_call.1} parent=43 // pred_region
          %433 = dma.done [#allocation10], 1024
        $region52: #{tpu_custom_call.1} parent=43 // pred_fallthru
          _
        %s434 = smul.u32 %s47, 2
        %s435 = sadd.s32 %s434, %s49
        %s436 = sld [smem:[#allocation3 + %s435]]
        %s437 = sld [smem:[#allocation5 + %s436]]
        %s438 = ssub.s32 %s437, 1
        %p439 = scmp.lt.s32.totalorder %s50, %s438
        %s440 = scalar_select %p439, %s50, %s438
        %s441 = smul.u32 16, %s48
        %p442 = scmp.lt.s32.totalorder %s436, 2
        %s443 = scalar_select %p442, %s436, 2
        %p444 = scmp.lt.s32.totalorder %s441, 15
        %s445 = scalar_select %p444, %s441, 15
        %p446 = scmp.lt.s32.totalorder %s440, 0
        %s447 = scalar_select %p446, %s440, 0
        %s448 = sadd.s32 %s447, %s445
        %s449 = smul.addr %s443, 16
        %s450 = sadd.s32 %s448, %s449
        %s451 = smul.addr %s450, 4
        %s452 = scalar_lea.vmem %s3, %s451
        %p453 = pneg %p106
        %p454 = pneg %p103
        %s455 = smul.u32 %s47, 2
        %s456 = sadd.s32 %s455, %s49
        %s457 = sld [smem:[#allocation3 + %s456]]
        %s458 = sld [smem:[#allocation5 + %s457]]
        %s459 = ssub.s32 %s458, 1
        %p460 = scmp.lt.s32.totalorder %s50, %s459
        %s461 = scalar_select %p460, %s50, %s459
        %s462 = smul.u32 16, %s461
        %p463 = scmp.lt.s32.totalorder %s457, 2
        %s464 = scalar_select %p463, %s457, 2
        %p465 = scmp.lt.s32.totalorder %s462, 15
        %s466 = scalar_select %p465, %s462, 15
        %s467 = smul.addr %s464, 16
        %s468 = sadd.s32 %s466, %s467
        %s469 = smul.addr %s468, 4
        %s470 = scalar_lea.vmem %s4, %s469
        %p471 = pneg %p148
        %p472 = pneg %p145
        %s473 = smul.u32 %s47, 2
        %s474 = sadd.s32 %s473, %s49
        %s475 = sld [smem:[#allocation3 + %s474]]
        %s476 = smul.u32 16, %s48
        %p477 = scmp.lt.s32.totalorder %s475, 2
        %s478 = scalar_select %p477, %s475, 2
        %p479 = scmp.lt.s32.totalorder %s476, 15
        %s480 = scalar_select %p479, %s476, 15
        %s481 = smul.addr %s478, 16
        %s482 = sadd.s32 %s480, %s481
        %s483 = smul.addr %s482, 8
        %s484 = scalar_lea.vmem %s5, %s483
        %p485 = pneg %p182
        %p486 = pneg %p179
        %s487 = sand.u32 %s197, 1
        %s488 = scalar_lea.sflag [#allocation7], %s487
        %s489 = sand.u32 %s197, 1
        %s490 = smul.addr %s489, 64
        %s491 = scalar_lea.vmem [#allocation6], %s490
        %p492 = pneg %p210
        %p493 = pneg %p207
        %p494 = pneg %p231
        %p495 = pneg %p228
        %p496 = pneg %p252
        %p497 = pneg %p249
        %p498 = pneg %p280
        %p499 = pneg %p277
        %s500 = sand.u32 %s267, 1
        %s501 = scalar_lea.sflag [#allocation8], %s500
        %s502 = sand.u32 %s267, 1
        %s503 = smul.addr %s502, 128
        %s504 = scalar_lea.vmem [#allocation11], %s503
        %s505 = smul.u32 %s47, 2
        %s506 = sadd.s32 %s505, %s49
        %s507 = sld [smem:[#allocation3 + %s506]]
        %s508 = sld [smem:[#allocation5 + %s507]]
        %s509 = ssub.s32 %s508, 1
        %p510 = scmp.lt.s32.totalorder %s50, %s509
        %s511 = scalar_select %p510, %s50, %s509
        %s512 = smul.u32 16, %s48
        %p513 = scmp.lt.s32.totalorder %s507, 2
        %s514 = scalar_select %p513, %s507, 2
        %p515 = scmp.lt.s32.totalorder %s512, 15
        %s516 = scalar_select %p515, %s512, 15
        %p517 = scmp.lt.s32.totalorder %s511, 0
        %s518 = scalar_select %p517, %s511, 0
        %s519 = sadd.s32 %s518, %s516
        %s520 = smul.addr %s514, 16
        %s521 = sadd.s32 %s519, %s520
        %s522 = smul.addr %s521, 4
        %s523 = scalar_lea.vmem %s3, %s522
        %s524 = smul.u32 %s47, 2
        %s525 = sadd.s32 %s524, %s49
        %s526 = sld [smem:[#allocation3 + %s525]]
        %s527 = sld [smem:[#allocation5 + %s526]]
        %s528 = ssub.s32 %s527, 1
        %p529 = scmp.lt.s32.totalorder %s50, %s528
        %s530 = scalar_select %p529, %s50, %s528
        %s531 = smul.u32 16, %s48
        %s532 = smul.u32 %s47, 2
        %s533 = sadd.s32 %s532, %s49
        %s534 = sld [smem:[#allocation3 + %s533]]
        %s535 = sld [smem:[#allocation5 + %s534]]
        %s536 = ssub.s32 %s535, 1
        %p537 = scmp.lt.s32.totalorder %s50, %s536
        %s538 = scalar_select %p537, %s50, %s536
        %s539 = smul.u32 16, %s538
        %p540 = scmp.lt.s32.totalorder %s534, 2
        %s541 = scalar_select %p540, %s534, 2
        %p542 = scmp.lt.s32.totalorder %s539, 15
        %s543 = scalar_select %p542, %s539, 15
        %s544 = smul.addr %s541, 16
        %s545 = sadd.s32 %s543, %s544
        %s546 = smul.addr %s545, 4
        %s547 = scalar_lea.vmem %s4, %s546
        %s548 = smul.u32 %s47, 2
        %s549 = sadd.s32 %s548, %s49
        %s550 = sld [smem:[#allocation3 + %s549]]
        %s551 = sld [smem:[#allocation5 + %s550]]
        %s552 = ssub.s32 %s551, 1
        %p553 = scmp.lt.s32.totalorder %s50, %s552
        %s554 = scalar_select %p553, %s50, %s552
        %s555 = smul.u32 16, %s554
        %s556 = smul.u32 %s47, 2
        %s557 = sadd.s32 %s556, %s49
        %s558 = sld [smem:[#allocation3 + %s557]]
        %s559 = smul.u32 16, %s48
        %p560 = scmp.lt.s32.totalorder %s558, 2
        %s561 = scalar_select %p560, %s558, 2
        %p562 = scmp.lt.s32.totalorder %s559, 15
        %s563 = scalar_select %p562, %s559, 15
        %s564 = smul.addr %s561, 16
        %s565 = sadd.s32 %s563, %s564
        %s566 = smul.addr %s565, 8
        %s567 = scalar_lea.vmem %s5, %s566
        %s568 = smul.u32 %s47, 2
        %s569 = sadd.s32 %s568, %s49
        %s570 = sld [smem:[#allocation3 + %s569]]
        %s571 = smul.u32 16, %s48
        %s572 = smul.u32 16, %s48
        %s573 = smul.u32 16, %s48
        %p575 = scmp.eq.s32.totalorder %s49, 0
        %p576 = scmp.eq.s32.totalorder %s50, 0
        %p577 = pnand %p575, %p576
        %p578 = pneg %p577
        // Predicated region
        $region53: #{tpu_custom_call.1} parent=43 // pred_check
          _
        $region54: #{tpu_custom_call.1} parent=43 // pred_check_branch
          %580 = sbr.rel (%p577) target = $region56
        $region55: #{tpu_custom_call.1} parent=43 // pred_region
          %v581 = vld [vmem:[%s425] sm:$0xf]
          %v582 = vld [vmem:[%s425 + $0x4] sm:$0xf]
          %v583 = vld [vmem:[%s425 + $0x8] sm:$0xf]
          %v584 = vld [vmem:[%s425 + $0xc] sm:$0xf]
          %v585 = vld [vmem:[%s425 + $0x10] sm:$0xf]
          %v586 = vld [vmem:[%s425 + $0x14] sm:$0xf]
          %v587 = vld [vmem:[%s425 + $0x18] sm:$0xf]
          %v588 = vld [vmem:[%s425 + $0x1c] sm:$0xf]
          %v589 = vld [vmem:[%s425 + $0x20] sm:$0xf]
          %v590 = vld [vmem:[%s425 + $0x24] sm:$0xf]
          %v591 = vld [vmem:[%s425 + $0x28] sm:$0xf]
          %v592 = vld [vmem:[%s425 + $0x2c] sm:$0xf]
          %v593 = vld [vmem:[%s425 + $0x30] sm:$0xf]
          %v594 = vld [vmem:[%s425 + $0x34] sm:$0xf]
          %v595 = vld [vmem:[%s425 + $0x38] sm:$0xf]
          %v596 = vld [vmem:[%s425 + $0x3c] sm:$0xf]
          %v597 = vld [vmem:[#allocation9] sm:$0xf]
          %v598 = vld [vmem:[#allocation9 + $0x4] sm:$0xf]
          %v599 = vld [vmem:[#allocation9 + $0x8] sm:$0xf]
          %v600 = vld [vmem:[#allocation9 + $0xc] sm:$0xf]
          %v601 = vld [vmem:[#allocation9 + $0x10] sm:$0xf]
          %v602 = vld [vmem:[#allocation9 + $0x14] sm:$0xf]
          %v603 = vld [vmem:[#allocation9 + $0x18] sm:$0xf]
          %v604 = vld [vmem:[#allocation9 + $0x1c] sm:$0xf]
          %v605 = vld [vmem:[#allocation9 + $0x20] sm:$0xf]
          %v606 = vld [vmem:[#allocation9 + $0x24] sm:$0xf]
          %v607 = vld [vmem:[#allocation9 + $0x28] sm:$0xf]
          %v608 = vld [vmem:[#allocation9 + $0x2c] sm:$0xf]
          %v609 = vld [vmem:[#allocation9 + $0x30] sm:$0xf]
          %v610 = vld [vmem:[#allocation9 + $0x34] sm:$0xf]
          %v611 = vld [vmem:[#allocation9 + $0x38] sm:$0xf]
          %v612 = vld [vmem:[#allocation9 + $0x3c] sm:$0xf]
          %v613 = vld [vmem:[%s8] sm:$0x1]
          %v615 = vlaneseq
          %v616 = vshrl.u32 %v615, 7
          %v617 = vsub.s32 0, %v616
          %v618 = vrot.slane %v613, %v617
          %v636 = vunpack.c.l.b16 %v581
          %v637 = vunpack.c.l.b16 %v582
          %v638 = vunpack.c.l.b16 %v583
          %v639 = vunpack.c.l.b16 %v584
          %v640 = vunpack.c.l.b16 %v585
          %v641 = vunpack.c.l.b16 %v586
          %v642 = vunpack.c.l.b16 %v587
          %v643 = vunpack.c.l.b16 %v588
          %v644 = vunpack.c.l.b16 %v589
          %v645 = vunpack.c.l.b16 %v590
          %v646 = vunpack.c.l.b16 %v591
          %v647 = vunpack.c.l.b16 %v592
          %v648 = vunpack.c.l.b16 %v593
          %v649 = vunpack.c.l.b16 %v594
          %v650 = vunpack.c.l.b16 %v595
          %v651 = vunpack.c.l.b16 %v596
          %v652 = vpack.c.b16 %v637, %v636
          %v653 = vpack.c.b16 %v639, %v638
          %v654 = vpack.c.b16 %v641, %v640
          %v655 = vpack.c.b16 %v643, %v642
          %v656 = vpack.c.b16 %v645, %v644
          %v657 = vpack.c.b16 %v647, %v646
          %v658 = vpack.c.b16 %v649, %v648
          %v659 = vpack.c.b16 %v651, %v650
          %v684 = vunpack.c.l.b16 %v597
          %v685 = vunpack.c.l.b16 %v598
          %v686 = vunpack.c.l.b16 %v599
          %v687 = vunpack.c.l.b16 %v600
          %v688 = vunpack.c.l.b16 %v601
          %v689 = vunpack.c.l.b16 %v602
          %v690 = vunpack.c.l.b16 %v603
          %v691 = vunpack.c.l.b16 %v604
          %v692 = vunpack.c.l.b16 %v605
          %v693 = vunpack.c.l.b16 %v606
          %v694 = vunpack.c.l.b16 %v607
          %v695 = vunpack.c.l.b16 %v608
          %v696 = vunpack.c.l.b16 %v609
          %v697 = vunpack.c.l.b16 %v610
          %v698 = vunpack.c.l.b16 %v611
          %v699 = vunpack.c.l.b16 %v612
          %v700 = vpack.c.b16 %v685, %v684
          %v701 = vpack.c.b16 %v687, %v686
          %v702 = vpack.c.b16 %v689, %v688
          %v703 = vpack.c.b16 %v691, %v690
          %v704 = vpack.c.b16 %v693, %v692
          %v705 = vpack.c.b16 %v695, %v694
          %v706 = vpack.c.b16 %v697, %v696
          %v707 = vpack.c.b16 %v699, %v698
          %716 = vmatprep.subr.bf16.mxu0 0
          %717 = vmatpush1.bf16.msra.mxu0 %v700
          %718 = vmatprep.subr.bf16.mxu0 0
          %719 = vmatpush1.bf16.msra.mxu0 %v701
          %720 = vmatprep.subr.bf16.mxu0 0
          %721 = vmatpush1.bf16.msra.mxu0 %v702
          %722 = vmatprep.subr.bf16.mxu0 0
          %723 = vmatpush1.bf16.msra.mxu0 %v703
          %724 = vmatprep.subr.bf16.mxu0 0
          %725 = vmatpush1.bf16.msra.mxu0 %v704
          %726 = vmatprep.subr.bf16.mxu0 0
          %727 = vmatpush1.bf16.msra.mxu0 %v705
          %728 = vmatprep.subr.bf16.mxu0 0
          %729 = vmatpush1.bf16.msra.mxu0 %v706
          %730 = vmatprep.subr.bf16.mxu0 0
          %731 = vmatpush1.bf16.msra.mxu0 %v707
          %732 = vmatprep.subr.bf16.mxu0 0
          %733 = vmatpush1.bf16.msra.mxu0 0
          %734 = vmatprep.subr.bf16.mxu0 0
          %735 = vmatpush1.bf16.msra.mxu0 0
          %736 = vmatprep.subr.bf16.mxu0 0
          %737 = vmatpush1.bf16.msra.mxu0 0
          %738 = vmatprep.subr.bf16.mxu0 0
          %739 = vmatpush1.bf16.msra.mxu0 0
          %740 = vmatprep.subr.bf16.mxu0 0
          %741 = vmatpush1.bf16.msra.mxu0 0
          %742 = vmatprep.subr.bf16.mxu0 0
          %743 = vmatpush1.bf16.msra.mxu0 0
          %744 = vmatprep.subr.bf16.mxu0 0
          %745 = vmatpush1.bf16.msra.mxu0 0
          %746 = vmatprep.subr.bf16.mxu0 0
          %747 = vmatpush1.bf16.msra.mxu0 0
          %748 = vmatprep.mubr.bf16.mxu0 0
          %749 = vmatmul.mubr.bf16.gmra.mrb[0].mxu0 %v652
          %v750 = vpop.f32.mrb[0].mxu0
          %v751 = vadd.f32 %v618, %v750
          %v752 = vpop.f32.mrb[0].mxu0
          %v753 = vpop.f32.mrb[0].mxu0
          %v754 = vadd.f32 %v618, %v753
          %v755 = vpop.f32.mrb[0].mxu0
          %756 = vmatprep.mubr.bf16.mxu0 0
          %757 = vmatmul.mubr.bf16.gmra.mrb[0].mxu0 %v653
          %v758 = vpop.f32.mrb[0].mxu0
          %v759 = vadd.f32 %v618, %v758
          %v760 = vpop.f32.mrb[0].mxu0
          %v761 = vpop.f32.mrb[0].mxu0
          %v762 = vadd.f32 %v618, %v761
          %v763 = vpop.f32.mrb[0].mxu0
          %764 = vmatprep.mubr.bf16.mxu0 0
          %765 = vmatmul.mubr.bf16.gmra.mrb[0].mxu0 %v654
          %v766 = vpop.f32.mrb[0].mxu0
          %v767 = vadd.f32 %v618, %v766
          %v768 = vpop.f32.mrb[0].mxu0
          %v769 = vpop.f32.mrb[0].mxu0
          %v770 = vadd.f32 %v618, %v769
          %v771 = vpop.f32.mrb[0].mxu0
          %772 = vmatprep.mubr.bf16.mxu0 0
          %773 = vmatmul.mubr.bf16.gmra.mrb[0].mxu0 %v655
          %v774 = vpop.f32.mrb[0].mxu0
          %v775 = vadd.f32 %v618, %v774
          %v776 = vpop.f32.mrb[0].mxu0
          %v777 = vpop.f32.mrb[0].mxu0
          %v778 = vadd.f32 %v618, %v777
          %v779 = vpop.f32.mrb[0].mxu0
          %780 = vmatprep.mubr.bf16.mxu0 0
          %781 = vmatmul.mubr.bf16.gmra.mrb[0].mxu0 %v656
          %v782 = vpop.f32.mrb[0].mxu0
          %v783 = vadd.f32 %v618, %v782
          %v784 = vpop.f32.mrb[0].mxu0
          %v785 = vpop.f32.mrb[0].mxu0
          %v786 = vadd.f32 %v618, %v785
          %v787 = vpop.f32.mrb[0].mxu0
          %788 = vmatprep.mubr.bf16.mxu0 0
          %789 = vmatmul.mubr.bf16.gmra.mrb[0].mxu0 %v657
          %v790 = vpop.f32.mrb[0].mxu0
          %v791 = vadd.f32 %v618, %v790
          %v792 = vpop.f32.mrb[0].mxu0
          %v793 = vpop.f32.mrb[0].mxu0
          %v794 = vadd.f32 %v618, %v793
          %v795 = vpop.f32.mrb[0].mxu0
          %796 = vmatprep.mubr.bf16.mxu0 0
          %797 = vmatmul.mubr.bf16.gmra.mrb[0].mxu0 %v658
          %v798 = vpop.f32.mrb[0].mxu0
          %v799 = vadd.f32 %v618, %v798
          %v800 = vpop.f32.mrb[0].mxu0
          %v801 = vpop.f32.mrb[0].mxu0
          %v802 = vadd.f32 %v618, %v801
          %v803 = vpop.f32.mrb[0].mxu0
          %804 = vmatprep.mubr.bf16.mxu0 0
          %805 = vmatmul.mubr.bf16.gmra.mrb[0].mxu0 %v659
          %v806 = vpop.f32.mrb[0].mxu0
          %v807 = vadd.f32 %v618, %v806
          %v808 = vpop.f32.mrb[0].mxu0
          %v809 = vpop.f32.mrb[0].mxu0
          %v810 = vadd.f32 %v618, %v809
          %v811 = vpop.f32.mrb[0].mxu0
          %812 = vdwg.mxu0
          %813 = vst [vmem:[%s504] sm:$0xff] %v751
          %814 = vst [vmem:[%s504 + $0x8] sm:$0xff] %v754
          %815 = vst [vmem:[%s504 + $0x10] sm:$0xff] %v759
          %816 = vst [vmem:[%s504 + $0x18] sm:$0xff] %v762
          %817 = vst [vmem:[%s504 + $0x20] sm:$0xff] %v767
          %818 = vst [vmem:[%s504 + $0x28] sm:$0xff] %v770
          %819 = vst [vmem:[%s504 + $0x30] sm:$0xff] %v775
          %820 = vst [vmem:[%s504 + $0x38] sm:$0xff] %v778
          %821 = vst [vmem:[%s504 + $0x40] sm:$0xff] %v783
          %822 = vst [vmem:[%s504 + $0x48] sm:$0xff] %v786
          %823 = vst [vmem:[%s504 + $0x50] sm:$0xff] %v791
          %824 = vst [vmem:[%s504 + $0x58] sm:$0xff] %v794
          %825 = vst [vmem:[%s504 + $0x60] sm:$0xff] %v799
          %826 = vst [vmem:[%s504 + $0x68] sm:$0xff] %v802
          %827 = vst [vmem:[%s504 + $0x70] sm:$0xff] %v807
          %828 = vst [vmem:[%s504 + $0x78] sm:$0xff] %v810
        $region56: #{tpu_custom_call.1} parent=43 // pred_fallthru
          _
        %s829 = smul.u32 %s47, 2
        %s830 = sadd.s32 %s829, %s49
        %s831 = sld [smem:[#allocation3 + %s830]]
        %s832 = sld [smem:[#allocation4 + %s47]]
        %p833 = scmp.lt.s32.totalorder %s49, %s832
        %s834 = sld [smem:[#allocation5 + %s831]]
        %p835 = scmp.lt.s32.totalorder %s50, %s834
        %p836 = pnand %p833, %p835
        %p837 = pneg %p836
        // Predicated region
        $region57: #{tpu_custom_call.1} parent=43 // pred_check
          _
        $region58: #{tpu_custom_call.1} parent=43 // pred_check_branch
          %839 = sbr.rel (%p836) target = $region60
        $region59: #{tpu_custom_call.1} parent=43 // pred_region
          %v840 = vld [vmem:[%s523] sm:$0xf]
          %v841 = vld [vmem:[%s523 + $0x4] sm:$0xf]
          %v842 = vld [vmem:[%s523 + $0x8] sm:$0xf]
          %v843 = vld [vmem:[%s523 + $0xc] sm:$0xf]
          %v844 = vld [vmem:[%s523 + $0x10] sm:$0xf]
          %v845 = vld [vmem:[%s523 + $0x14] sm:$0xf]
          %v846 = vld [vmem:[%s523 + $0x18] sm:$0xf]
          %v847 = vld [vmem:[%s523 + $0x1c] sm:$0xf]
          %v848 = vld [vmem:[%s523 + $0x20] sm:$0xf]
          %v849 = vld [vmem:[%s523 + $0x24] sm:$0xf]
          %v850 = vld [vmem:[%s523 + $0x28] sm:$0xf]
          %v851 = vld [vmem:[%s523 + $0x2c] sm:$0xf]
          %v852 = vld [vmem:[%s523 + $0x30] sm:$0xf]
          %v853 = vld [vmem:[%s523 + $0x34] sm:$0xf]
          %v854 = vld [vmem:[%s523 + $0x38] sm:$0xf]
          %v855 = vld [vmem:[%s523 + $0x3c] sm:$0xf]
          %v856 = vld [vmem:[%s547] sm:$0xf]
          %v857 = vld [vmem:[%s547 + $0x4] sm:$0xf]
          %v858 = vld [vmem:[%s547 + $0x8] sm:$0xf]
          %v859 = vld [vmem:[%s547 + $0xc] sm:$0xf]
          %v860 = vld [vmem:[%s547 + $0x10] sm:$0xf]
          %v861 = vld [vmem:[%s547 + $0x14] sm:$0xf]
          %v862 = vld [vmem:[%s547 + $0x18] sm:$0xf]
          %v863 = vld [vmem:[%s547 + $0x1c] sm:$0xf]
          %v864 = vld [vmem:[%s547 + $0x20] sm:$0xf]
          %v865 = vld [vmem:[%s547 + $0x24] sm:$0xf]
          %v866 = vld [vmem:[%s547 + $0x28] sm:$0xf]
          %v867 = vld [vmem:[%s547 + $0x2c] sm:$0xf]
          %v868 = vld [vmem:[%s547 + $0x30] sm:$0xf]
          %v869 = vld [vmem:[%s547 + $0x34] sm:$0xf]
          %v870 = vld [vmem:[%s547 + $0x38] sm:$0xf]
          %v871 = vld [vmem:[%s547 + $0x3c] sm:$0xf]
          %v888 = vunpack.c.l.b16 %v840
          %v889 = vunpack.c.l.b16 %v841
          %v890 = vunpack.c.l.b16 %v842
          %v891 = vunpack.c.l.b16 %v843
          %v892 = vunpack.c.l.b16 %v844
          %v893 = vunpack.c.l.b16 %v845
          %v894 = vunpack.c.l.b16 %v846
          %v895 = vunpack.c.l.b16 %v847
          %v896 = vunpack.c.l.b16 %v848
          %v897 = vunpack.c.l.b16 %v849
          %v898 = vunpack.c.l.b16 %v850
          %v899 = vunpack.c.l.b16 %v851
          %v900 = vunpack.c.l.b16 %v852
          %v901 = vunpack.c.l.b16 %v853
          %v902 = vunpack.c.l.b16 %v854
          %v903 = vunpack.c.l.b16 %v855
          %v904 = vpack.c.b16 %v889, %v888
          %v905 = vpack.c.b16 %v891, %v890
          %v906 = vpack.c.b16 %v893, %v892
          %v907 = vpack.c.b16 %v895, %v894
          %v908 = vpack.c.b16 %v897, %v896
          %v909 = vpack.c.b16 %v899, %v898
          %v910 = vpack.c.b16 %v901, %v900
          %v911 = vpack.c.b16 %v903, %v902
          %v936 = vunpack.c.l.b16 %v856
          %v937 = vunpack.c.l.b16 %v857
          %v938 = vunpack.c.l.b16 %v858
          %v939 = vunpack.c.l.b16 %v859
          %v940 = vunpack.c.l.b16 %v860
          %v941 = vunpack.c.l.b16 %v861
          %v942 = vunpack.c.l.b16 %v862
          %v943 = vunpack.c.l.b16 %v863
          %v944 = vunpack.c.l.b16 %v864
          %v945 = vunpack.c.l.b16 %v865
          %v946 = vunpack.c.l.b16 %v866
          %v947 = vunpack.c.l.b16 %v867
          %v948 = vunpack.c.l.b16 %v868
          %v949 = vunpack.c.l.b16 %v869
          %v950 = vunpack.c.l.b16 %v870
          %v951 = vunpack.c.l.b16 %v871
          %v952 = vpack.c.b16 %v937, %v936
          %v953 = vpack.c.b16 %v939, %v938
          %v954 = vpack.c.b16 %v941, %v940
          %v955 = vpack.c.b16 %v943, %v942
          %v956 = vpack.c.b16 %v945, %v944
          %v957 = vpack.c.b16 %v947, %v946
          %v958 = vpack.c.b16 %v949, %v948
          %v959 = vpack.c.b16 %v951, %v950
          %968 = vmatprep.subr.bf16.mxu0 0
          %969 = vmatpush1.bf16.msra.mxu0 %v952
          %970 = vmatprep.subr.bf16.mxu0 0
          %971 = vmatpush1.bf16.msra.mxu0 %v953
          %972 = vmatprep.subr.bf16.mxu0 0
          %973 = vmatpush1.bf16.msra.mxu0 %v954
          %974 = vmatprep.subr.bf16.mxu0 0
          %975 = vmatpush1.bf16.msra.mxu0 %v955
          %976 = vmatprep.subr.bf16.mxu0 0
          %977 = vmatpush1.bf16.msra.mxu0 %v956
          %978 = vmatprep.subr.bf16.mxu0 0
          %979 = vmatpush1.bf16.msra.mxu0 %v957
          %980 = vmatprep.subr.bf16.mxu0 0
          %981 = vmatpush1.bf16.msra.mxu0 %v958
          %982 = vmatprep.subr.bf16.mxu0 0
          %983 = vmatpush1.bf16.msra.mxu0 %v959
          %984 = vmatprep.subr.bf16.mxu0 0
          %985 = vmatpush1.bf16.msra.mxu0 0
          %986 = vmatprep.subr.bf16.mxu0 0
          %987 = vmatpush1.bf16.msra.mxu0 0
          %988 = vmatprep.subr.bf16.mxu0 0
          %989 = vmatpush1.bf16.msra.mxu0 0
          %990 = vmatprep.subr.bf16.mxu0 0
          %991 = vmatpush1.bf16.msra.mxu0 0
          %992 = vmatprep.subr.bf16.mxu0 0
          %993 = vmatpush1.bf16.msra.mxu0 0
          %994 = vmatprep.subr.bf16.mxu0 0
          %995 = vmatpush1.bf16.msra.mxu0 0
          %996 = vmatprep.subr.bf16.mxu0 0
          %997 = vmatpush1.bf16.msra.mxu0 0
          %998 = vmatprep.subr.bf16.mxu0 0
          %999 = vmatpush1.bf16.msra.mxu0 0
          %1000 = vmatprep.mubr.bf16.mxu0 0
          %1001 = vmatmul.mubr.bf16.gmra.mrb[0].mxu0 %v904
          %v1002 = vpop.f32.mrb[0].mxu0
          %v1003 = vadd.f32 0.0, %v1002
          %v1004 = vpop.f32.mrb[0].mxu0
          %v1005 = vpop.f32.mrb[0].mxu0
          %v1006 = vadd.f32 0.0, %v1005
          %v1007 = vpop.f32.mrb[0].mxu0
          %1008 = vmatprep.mubr.bf16.mxu0 0
          %1009 = vmatmul.mubr.bf16.gmra.mrb[0].mxu0 %v905
          %v1010 = vpop.f32.mrb[0].mxu0
          %v1011 = vadd.f32 0.0, %v1010
          %v1012 = vpop.f32.mrb[0].mxu0
          %v1013 = vpop.f32.mrb[0].mxu0
          %v1014 = vadd.f32 0.0, %v1013
          %v1015 = vpop.f32.mrb[0].mxu0
          %1016 = vmatprep.mubr.bf16.mxu0 0
          %1017 = vmatmul.mubr.bf16.gmra.mrb[0].mxu0 %v906
          %v1018 = vpop.f32.mrb[0].mxu0
          %v1019 = vadd.f32 0.0, %v1018
          %v1020 = vpop.f32.mrb[0].mxu0
          %v1021 = vpop.f32.mrb[0].mxu0
          %v1022 = vadd.f32 0.0, %v1021
          %v1023 = vpop.f32.mrb[0].mxu0
          %1024 = vmatprep.mubr.bf16.mxu0 0
          %1025 = vmatmul.mubr.bf16.gmra.mrb[0].mxu0 %v907
          %v1026 = vpop.f32.mrb[0].mxu0
          %v1027 = vadd.f32 0.0, %v1026
          %v1028 = vpop.f32.mrb[0].mxu0
          %v1029 = vpop.f32.mrb[0].mxu0
          %v1030 = vadd.f32 0.0, %v1029
          %v1031 = vpop.f32.mrb[0].mxu0
          %1032 = vmatprep.mubr.bf16.mxu0 0
          %1033 = vmatmul.mubr.bf16.gmra.mrb[0].mxu0 %v908
          %v1034 = vpop.f32.mrb[0].mxu0
          %v1035 = vadd.f32 0.0, %v1034
          %v1036 = vpop.f32.mrb[0].mxu0
          %v1037 = vpop.f32.mrb[0].mxu0
          %v1038 = vadd.f32 0.0, %v1037
          %v1039 = vpop.f32.mrb[0].mxu0
          %1040 = vmatprep.mubr.bf16.mxu0 0
          %1041 = vmatmul.mubr.bf16.gmra.mrb[0].mxu0 %v909
          %v1042 = vpop.f32.mrb[0].mxu0
          %v1043 = vadd.f32 0.0, %v1042
          %v1044 = vpop.f32.mrb[0].mxu0
          %v1045 = vpop.f32.mrb[0].mxu0
          %v1046 = vadd.f32 0.0, %v1045
          %v1047 = vpop.f32.mrb[0].mxu0
          %1048 = vmatprep.mubr.bf16.mxu0 0
          %1049 = vmatmul.mubr.bf16.gmra.mrb[0].mxu0 %v910
          %v1050 = vpop.f32.mrb[0].mxu0
          %v1051 = vadd.f32 0.0, %v1050
          %v1052 = vpop.f32.mrb[0].mxu0
          %v1053 = vpop.f32.mrb[0].mxu0
          %v1054 = vadd.f32 0.0, %v1053
          %v1055 = vpop.f32.mrb[0].mxu0
          %1056 = vmatprep.mubr.bf16.mxu0 0
          %1057 = vmatmul.mubr.bf16.gmra.mrb[0].mxu0 %v911
          %v1058 = vpop.f32.mrb[0].mxu0
          %v1059 = vadd.f32 0.0, %v1058
          %v1060 = vpop.f32.mrb[0].mxu0
          %v1061 = vpop.f32.mrb[0].mxu0
          %v1062 = vadd.f32 0.0, %v1061
          %v1063 = vpop.f32.mrb[0].mxu0
          %1064 = vdwg.mxu0
          %v1065 = vld [vmem:[%s504] sm:$0xff]
          %v1066 = vld [vmem:[%s504 + $0x8] sm:$0xff]
          %v1067 = vld [vmem:[%s504 + $0x10] sm:$0xff]
          %v1068 = vld [vmem:[%s504 + $0x18] sm:$0xff]
          %v1069 = vld [vmem:[%s504 + $0x20] sm:$0xff]
          %v1070 = vld [vmem:[%s504 + $0x28] sm:$0xff]
          %v1071 = vld [vmem:[%s504 + $0x30] sm:$0xff]
          %v1072 = vld [vmem:[%s504 + $0x38] sm:$0xff]
          %v1073 = vld [vmem:[%s504 + $0x40] sm:$0xff]
          %v1074 = vld [vmem:[%s504 + $0x48] sm:$0xff]
          %v1075 = vld [vmem:[%s504 + $0x50] sm:$0xff]
          %v1076 = vld [vmem:[%s504 + $0x58] sm:$0xff]
          %v1077 = vld [vmem:[%s504 + $0x60] sm:$0xff]
          %v1078 = vld [vmem:[%s504 + $0x68] sm:$0xff]
          %v1079 = vld [vmem:[%s504 + $0x70] sm:$0xff]
          %v1080 = vld [vmem:[%s504 + $0x78] sm:$0xff]
          %v1081 = vld [vmem:[%s567] sm:$0xff]
          %v1082 = vld [vmem:[%s567 + $0x8] sm:$0xff]
          %v1083 = vld [vmem:[%s567 + $0x10] sm:$0xff]
          %v1084 = vld [vmem:[%s567 + $0x18] sm:$0xff]
          %v1085 = vld [vmem:[%s567 + $0x20] sm:$0xff]
          %v1086 = vld [vmem:[%s567 + $0x28] sm:$0xff]
          %v1087 = vld [vmem:[%s567 + $0x30] sm:$0xff]
          %v1088 = vld [vmem:[%s567 + $0x38] sm:$0xff]
          %v1089 = vld [vmem:[%s567 + $0x40] sm:$0xff]
          %v1090 = vld [vmem:[%s567 + $0x48] sm:$0xff]
          %v1091 = vld [vmem:[%s567 + $0x50] sm:$0xff]
          %v1092 = vld [vmem:[%s567 + $0x58] sm:$0xff]
          %v1093 = vld [vmem:[%s567 + $0x60] sm:$0xff]
          %v1094 = vld [vmem:[%s567 + $0x68] sm:$0xff]
          %v1095 = vld [vmem:[%s567 + $0x70] sm:$0xff]
          %v1096 = vld [vmem:[%s567 + $0x78] sm:$0xff]
          %1098 = vset.pattern.permute.xlu0 0
          %1099 = vperm.xlu0 %1098, %v1081
          %v1100 = vpop.permute.xlu0 %1099
          %1103 = vset.pattern.permute.xlu0 0
          %1104 = vperm.xlu0 %1103, %v1082
          %v1105 = vpop.permute.xlu0 %1104
          %1108 = vset.pattern.permute.xlu0 0
          %1109 = vperm.xlu0 %1108, %v1083
          %v1110 = vpop.permute.xlu0 %1109
          %1113 = vset.pattern.permute.xlu0 0
          %1114 = vperm.xlu0 %1113, %v1084
          %v1115 = vpop.permute.xlu0 %1114
          %1118 = vset.pattern.permute.xlu0 0
          %1119 = vperm.xlu0 %1118, %v1085
          %v1120 = vpop.permute.xlu0 %1119
          %1123 = vset.pattern.permute.xlu0 0
          %1124 = vperm.xlu0 %1123, %v1086
          %v1125 = vpop.permute.xlu0 %1124
          %1128 = vset.pattern.permute.xlu0 0
          %1129 = vperm.xlu0 %1128, %v1087
          %v1130 = vpop.permute.xlu0 %1129
          %1133 = vset.pattern.permute.xlu0 0
          %1134 = vperm.xlu0 %1133, %v1088
          %v1135 = vpop.permute.xlu0 %1134
          %1138 = vset.pattern.permute.xlu0 0
          %1139 = vperm.xlu0 %1138, %v1089
          %v1140 = vpop.permute.xlu0 %1139
          %1143 = vset.pattern.permute.xlu0 0
          %1144 = vperm.xlu0 %1143, %v1090
          %v1145 = vpop.permute.xlu0 %1144
          %1148 = vset.pattern.permute.xlu0 0
          %1149 = vperm.xlu0 %1148, %v1091
          %v1150 = vpop.permute.xlu0 %1149
          %1153 = vset.pattern.permute.xlu0 0
          %1154 = vperm.xlu0 %1153, %v1092
          %v1155 = vpop.permute.xlu0 %1154
          %1158 = vset.pattern.permute.xlu0 0
          %1159 = vperm.xlu0 %1158, %v1093
          %v1160 = vpop.permute.xlu0 %1159
          %1163 = vset.pattern.permute.xlu0 0
          %1164 = vperm.xlu0 %1163, %v1094
          %v1165 = vpop.permute.xlu0 %1164
          %1168 = vset.pattern.permute.xlu0 0
          %1169 = vperm.xlu0 %1168, %v1095
          %v1170 = vpop.permute.xlu0 %1169
          %1173 = vset.pattern.permute.xlu0 0
          %1174 = vperm.xlu0 %1173, %v1096
          %v1175 = vpop.permute.xlu0 %1174
          %v1177 = vmul.f32 %v1100, %v1003
          %v1178 = vmul.f32 %v1105, %v1006
          %v1179 = vmul.f32 %v1110, %v1011
          %v1180 = vmul.f32 %v1115, %v1014
          %v1181 = vmul.f32 %v1120, %v1019
          %v1182 = vmul.f32 %v1125, %v1022
          %v1183 = vmul.f32 %v1130, %v1027
          %v1184 = vmul.f32 %v1135, %v1030
          %v1185 = vmul.f32 %v1140, %v1035
          %v1186 = vmul.f32 %v1145, %v1038
          %v1187 = vmul.f32 %v1150, %v1043
          %v1188 = vmul.f32 %v1155, %v1046
          %v1189 = vmul.f32 %v1160, %v1051
          %v1190 = vmul.f32 %v1165, %v1054
          %v1191 = vmul.f32 %v1170, %v1059
          %v1192 = vmul.f32 %v1175, %v1062
          %v1193 = vadd.f32 %v1065, %v1177
          %v1194 = vadd.f32 %v1066, %v1178
          %v1195 = vadd.f32 %v1067, %v1179
          %v1196 = vadd.f32 %v1068, %v1180
          %v1197 = vadd.f32 %v1069, %v1181
          %v1198 = vadd.f32 %v1070, %v1182
          %v1199 = vadd.f32 %v1071, %v1183
          %v1200 = vadd.f32 %v1072, %v1184
          %v1201 = vadd.f32 %v1073, %v1185
          %v1202 = vadd.f32 %v1074, %v1186
          %v1203 = vadd.f32 %v1075, %v1187
          %v1204 = vadd.f32 %v1076, %v1188
          %v1205 = vadd.f32 %v1077, %v1189
          %v1206 = vadd.f32 %v1078, %v1190
          %v1207 = vadd.f32 %v1079, %v1191
          %v1208 = vadd.f32 %v1080, %v1192
          %1209 = vst [vmem:[%s504] sm:$0xff] %v1193
          %1210 = vst [vmem:[%s504 + $0x8] sm:$0xff] %v1194
          %1211 = vst [vmem:[%s504 + $0x10] sm:$0xff] %v1195
          %1212 = vst [vmem:[%s504 + $0x18] sm:$0xff] %v1196
          %1213 = vst [vmem:[%s504 + $0x20] sm:$0xff] %v1197
          %1214 = vst [vmem:[%s504 + $0x28] sm:$0xff] %v1198
          %1215 = vst [vmem:[%s504 + $0x30] sm:$0xff] %v1199
          %1216 = vst [vmem:[%s504 + $0x38] sm:$0xff] %v1200
          %1217 = vst [vmem:[%s504 + $0x40] sm:$0xff] %v1201
          %1218 = vst [vmem:[%s504 + $0x48] sm:$0xff] %v1202
          %1219 = vst [vmem:[%s504 + $0x50] sm:$0xff] %v1203
          %1220 = vst [vmem:[%s504 + $0x58] sm:$0xff] %v1204
          %1221 = vst [vmem:[%s504 + $0x60] sm:$0xff] %v1205
          %1222 = vst [vmem:[%s504 + $0x68] sm:$0xff] %v1206
          %1223 = vst [vmem:[%s504 + $0x70] sm:$0xff] %v1207
          %1224 = vst [vmem:[%s504 + $0x78] sm:$0xff] %v1208
        $region60: #{tpu_custom_call.1} parent=43 // pred_fallthru
          _
        %p1225 = scmp.eq.s32.totalorder %s49, 1
        %p1226 = pnand %p1225, %p576
        %p1227 = pneg %p1226
        // Predicated region
        $region61: #{tpu_custom_call.1} parent=43 // pred_check
          _
        $region62: #{tpu_custom_call.1} parent=43 // pred_check_branch
          %1229 = sbr.rel (%p1226) target = $region64
        $region63: #{tpu_custom_call.1} parent=43 // pred_region
          %v1230 = vld [vmem:[%s504] sm:$0xff]
          %v1231 = vld [vmem:[%s504 + $0x8] sm:$0xff]
          %v1232 = vld [vmem:[%s504 + $0x10] sm:$0xff]
          %v1233 = vld [vmem:[%s504 + $0x18] sm:$0xff]
          %v1234 = vld [vmem:[%s504 + $0x20] sm:$0xff]
          %v1235 = vld [vmem:[%s504 + $0x28] sm:$0xff]
          %v1236 = vld [vmem:[%s504 + $0x30] sm:$0xff]
          %v1237 = vld [vmem:[%s504 + $0x38] sm:$0xff]
          %v1238 = vld [vmem:[%s504 + $0x40] sm:$0xff]
          %v1239 = vld [vmem:[%s504 + $0x48] sm:$0xff]
          %v1240 = vld [vmem:[%s504 + $0x50] sm:$0xff]
          %v1241 = vld [vmem:[%s504 + $0x58] sm:$0xff]
          %v1242 = vld [vmem:[%s504 + $0x60] sm:$0xff]
          %v1243 = vld [vmem:[%s504 + $0x68] sm:$0xff]
          %v1244 = vld [vmem:[%s504 + $0x70] sm:$0xff]
          %v1245 = vld [vmem:[%s504 + $0x78] sm:$0xff]
          %v1246 = vmax.f32 %v1230, 0.0
          %v1247 = vmax.f32 %v1231, 0.0
          %v1248 = vmax.f32 %v1232, 0.0
          %v1249 = vmax.f32 %v1233, 0.0
          %v1250 = vmax.f32 %v1234, 0.0
          %v1251 = vmax.f32 %v1235, 0.0
          %v1252 = vmax.f32 %v1236, 0.0
          %v1253 = vmax.f32 %v1237, 0.0
          %v1254 = vmax.f32 %v1238, 0.0
          %v1255 = vmax.f32 %v1239, 0.0
          %v1256 = vmax.f32 %v1240, 0.0
          %v1257 = vmax.f32 %v1241, 0.0
          %v1258 = vmax.f32 %v1242, 0.0
          %v1259 = vmax.f32 %v1243, 0.0
          %v1260 = vmax.f32 %v1244, 0.0
          %v1261 = vmax.f32 %v1245, 0.0
          %1262 = vst [vmem:[%s504] sm:$0xff] %v1246
          %1263 = vst [vmem:[%s504 + $0x8] sm:$0xff] %v1247
          %1264 = vst [vmem:[%s504 + $0x10] sm:$0xff] %v1248
          %1265 = vst [vmem:[%s504 + $0x18] sm:$0xff] %v1249
          %1266 = vst [vmem:[%s504 + $0x20] sm:$0xff] %v1250
          %1267 = vst [vmem:[%s504 + $0x28] sm:$0xff] %v1251
          %1268 = vst [vmem:[%s504 + $0x30] sm:$0xff] %v1252
          %1269 = vst [vmem:[%s504 + $0x38] sm:$0xff] %v1253
          %1270 = vst [vmem:[%s504 + $0x40] sm:$0xff] %v1254
          %1271 = vst [vmem:[%s504 + $0x48] sm:$0xff] %v1255
          %1272 = vst [vmem:[%s504 + $0x50] sm:$0xff] %v1256
          %1273 = vst [vmem:[%s504 + $0x58] sm:$0xff] %v1257
          %1274 = vst [vmem:[%s504 + $0x60] sm:$0xff] %v1258
          %1275 = vst [vmem:[%s504 + $0x68] sm:$0xff] %v1259
          %1276 = vst [vmem:[%s504 + $0x70] sm:$0xff] %v1260
          %1277 = vst [vmem:[%s504 + $0x78] sm:$0xff] %v1261
        $region64: #{tpu_custom_call.1} parent=43 // pred_fallthru
          _
        %s1278 = sand.u32 %s267, 1
        %s1279 = scalar_lea.sflag [#allocation8], %s1278
        %s1280 = sand.u32 %s267, 1
        %s1281 = smul.addr %s1280, 128
        %s1282 = scalar_lea.vmem [#allocation11], %s1281
        // Predicated region
        $region65: #{tpu_custom_call.1} parent=43 // pred_check
          %p1283 = pneg %p277
        $region66: #{tpu_custom_call.1} parent=43 // pred_check_branch
          %1285 = sbr.rel (%p1283) target = $region68
        $region67: #{tpu_custom_call.1} parent=43 // pred_region
          %s1286 = smul.u32 16, %s48
          %s1288 = ssub.s32 2048, 2048
          %1289 = vsyncadd %s1279, %s1288
          %s1290 = smul.addr %s47, 16
          %s1291 = sadd.s32 %s1286, %s1290
          %s1292 = smul.addr %s1291, 128
          %s1293 = scalar_lea.hbm %s9, %s1292
          %s1294 = sshll.u32 %s1282, 4
          %s1295 = int_to_ptr.vmem [resolvable:$true] %s1294
          %1300 = dma.vmem_to_hbm [thread:$0]  %s1295, 2048, %s1293, %s1279, 128, 128, 8
        $region68: #{tpu_custom_call.1} parent=43 // pred_fallthru
          _
      $region44: #{tpu_custom_call.1} parent=5 // pred_fallthru
        _
      %p1301 = scmp.le.s32.totalorder 2, %s36
      // Predicated region
      $region69: #{tpu_custom_call.1} parent=5 // pred_check
        %p1302 = pneg %p1301
      $region70: #{tpu_custom_call.1} parent=5 // pred_check_branch
        %1304 = sbr.rel (%p1302) target = $region72
      $region71: #{tpu_custom_call.1} parent=5 // pred_region
        %s1305 = ssub.s32 %s36, 2
        // Predicated region
        $region73: #{tpu_custom_call.1} parent=71 // pred_check
          %p1306 = pneg %p283
        $region74: #{tpu_custom_call.1} parent=71 // pred_check_branch
          %1308 = sbr.rel (%p1306) target = $region76
        $region75: #{tpu_custom_call.1} parent=71 // pred_region
          %s1309 = sand.u32 %s268, 1
          %s1310 = scalar_lea.sflag [#allocation8], %s1309
          %s1311 = sand.u32 %s268, 1
          %s1312 = smul.addr %s1311, 128
          %s1313 = scalar_lea.vmem [#allocation11], %s1312
          %1314 = dma.done %s1310, 2048
        $region76: #{tpu_custom_call.1} parent=71 // pred_fallthru
          _
      $region72: #{tpu_custom_call.1} parent=5 // pred_fallthru
        _
    $region6: #{tpu_custom_call.1} parent=1 // loop_footer
      %s40 = sadd.s32 1, %s36
    $region7: #{tpu_custom_call.1} parent=1 // loop_footer_branch
      %35 = sbr.rel target = $region3
    $region8: #{tpu_custom_call.1} parent=1 // loop_exit
      _
    %1315 = vsyncpa [#allocation7], 1
    %s1316 = scalar_lea.sflag [#allocation7], 1
    %1317 = vsyncpa %s1316, 1
    %1318 = vsyncpa [#allocation10], 1
    %1319 = vsyncpa [#allocation8], 1
    %s1320 = scalar_lea.sflag [#allocation8], 1
    %1321 = vsyncpa %s1320, 1

</llo_original>
